<compile_context>
chip_gen: v7x
topology: tpu7x:2x2x1
jax: 0.10.0
libtpu: 0.0.40
codegen_flags: <defaults>
</compile_context>

<pallas_src>
import functools

import jax
import jax.numpy as jnp
from jax.experimental import pallas as pl
from jax.experimental.pallas import tpu as pltpu


def _vmem_limit(block_bytes):
    # Per-kernel scoped-VMEM cap: double-buffered block working set plus
    # compiler headroom, clamped well under the chip's physical VMEM.
    lim = 2 * int(block_bytes) + (8 << 20)
    lim = max(lim, 16 << 20)
    try:
        cap = int(pltpu.get_tpu_info().vmem_capacity_bytes)
        lim = min(lim, (3 * cap) // 4)
    except Exception:
        lim = min(lim, 48 << 20)
    return int(lim)


_VMEM = pl.BlockSpec(memory_space=pltpu.MemorySpace.VMEM)


def _leaky(h):
    return jnp.where(h >= 0, h, 0.01 * h)   # torch LeakyReLU default slope


def _bf16(a):
    return a.astype(jnp.bfloat16)


# ---------------------------------------------------------------------------
# l0: Linear(in, in//2) + LeakyReLU, row-tiled over nodes
# ---------------------------------------------------------------------------
def _l0_kernel(x_ref, wt_ref, b_ref, o_ref):
    h = jnp.dot(_bf16(x_ref[...]), wt_ref[...],
                preferred_element_type=jnp.float32)
    o_ref[...] = _leaky(h + b_ref[...])


def l0_linear(x, wt, b, *, tm=512):
    m, k = x.shape
    n = wt.shape[1]
    tm_eff = m if m <= tm else tm          # small bags: one block; big bags: 512-row tiles
    blk = tm_eff * k * 4 + k * n * 2 + n * 4 + tm_eff * n * 4
    return pl.pallas_call(
        _l0_kernel,
        out_shape=jax.ShapeDtypeStruct((m, n), jnp.float32),
        grid_spec=pltpu.PrefetchScalarGridSpec(
            num_scalar_prefetch=0,
            grid=(pl.cdiv(m, tm_eff),),
            in_specs=[pl.BlockSpec((tm_eff, k), lambda i: (i, 0)),
                      pl.BlockSpec((k, n), lambda i: (0, 0)),
                      pl.BlockSpec((1, n), lambda i: (0, 0))],
            out_specs=pl.BlockSpec((tm_eff, n), lambda i: (i, 0))),
        compiler_params=pltpu.CompilerParams(
            dimension_semantics=("parallel",),
            vmem_limit_bytes=_vmem_limit(blk)),
    )(x, wt, b)


# ---------------------------------------------------------------------------
# Graph conv: mean-aggregate -> Linear -> LayerNorm -> LeakyReLU (fused).
# Only the scale-(i+1) rows are produced (the only rows read downstream),
# output-row tiled with a "parallel" grid (shards across v7x's 2 TCs).
# ---------------------------------------------------------------------------
def _gcn_kernel(alo_ref, ahi_ref, xlo_ref, xhi_ref, wt_ref, b_ref,
                g_ref, beta_ref, o_ref):
    # TODO(synk): SimapleAvgGraphConv is not defined in the source file;
    # assumed mean aggregation over incoming edges followed by Linear.
    agg = (jnp.dot(alo_ref[...], _bf16(xlo_ref[...]),
                   preferred_element_type=jnp.float32)
           + jnp.dot(ahi_ref[...], _bf16(xhi_ref[...]),
                     preferred_element_type=jnp.float32))
    h = jnp.dot(_bf16(agg), wt_ref[...],
                preferred_element_type=jnp.float32) + b_ref[...]
    # two-pass LayerNorm stats (avoids E[h^2] - E[h]^2 cancellation)
    mu = jnp.mean(h, axis=-1, keepdims=True)
    c = h - mu
    var = jnp.mean(c * c, axis=-1, keepdims=True)
    hn = c * jax.lax.rsqrt(var + 1e-5)
    o_ref[...] = _leaky(hn * g_ref[...] + beta_ref[...])


def gcn_conv(a_lo, a_hi, x_lo, x_hi, p):
    p_out, p_lo = a_lo.shape
    p_hi = a_hi.shape[1]
    d = x_lo.shape[1]
    tm = p_out if p_out <= 512 else 256
    blk = (tm * (p_lo + p_hi) * 2 + (p_lo + p_hi) * d * 4
           + d * d * 2 + 3 * d * 4 + tm * d * 4)
    return pl.pallas_call(
        _gcn_kernel,
        out_shape=jax.ShapeDtypeStruct((p_out, d), jnp.float32),
        grid_spec=pltpu.PrefetchScalarGridSpec(
            num_scalar_prefetch=0,
            grid=(pl.cdiv(p_out, tm),),
            in_specs=[pl.BlockSpec((tm, p_lo), lambda i: (i, 0)),
                      pl.BlockSpec((tm, p_hi), lambda i: (i, 0)),
                      pl.BlockSpec((p_lo, d), lambda i: (0, 0)),
                      pl.BlockSpec((p_hi, d), lambda i: (0, 0)),
                      pl.BlockSpec((d, d), lambda i: (0, 0)),
                      pl.BlockSpec((1, d), lambda i: (0, 0)),
                      pl.BlockSpec((1, d), lambda i: (0, 0)),
                      pl.BlockSpec((1, d), lambda i: (0, 0))],
            out_specs=pl.BlockSpec((tm, d), lambda i: (i, 0))),
        compiler_params=pltpu.CompilerParams(
            dimension_semantics=("parallel",),
            vmem_limit_bytes=_vmem_limit(blk)),
    )(a_lo, a_hi, x_lo, x_hi, p["wt"], p["b"], p["gamma"], p["beta"])


# ---------------------------------------------------------------------------
# Gated attention pooling, batched over scales (grid axis = scale, "parallel")
# ---------------------------------------------------------------------------
def _attn_kernel(nv_ref, x_ref, wl1_ref, bl1_ref, w12_ref, b12_ref,
                 w3_ref, b3_ref, pooled_ref, att_ref, *, d):
    nv = nv_ref[pl.program_id(0)]                      # valid node count of this scale
    x = _bf16(x_ref[...])                              # (n_pad, d)
    # att_l1: Linear + LeakyReLU
    h = _leaky(jnp.dot(x, wl1_ref[...], preferred_element_type=jnp.float32)
               + bl1_ref[...])
    # gated attention: one fused (d, 2d) matmul for the tanh / sigmoid branches
    h12 = (jnp.dot(_bf16(h), w12_ref[...], preferred_element_type=jnp.float32)
           + b12_ref[...])
    g = jnp.tanh(h12[:, :d]) * jax.nn.sigmoid(h12[:, d:])
    # att3 as a lane-dense (1, n_pad) row: contract w3 (1,d) with g (n_pad,d)
    logits = jax.lax.dot_general(
        w3_ref[...], _bf16(g), (((1,), (1,)), ((), ())),
        preferred_element_type=jnp.float32) + b3_ref[...]          # (1, n_pad)
    lane = jax.lax.broadcasted_iota(jnp.int32, logits.shape, 1)
    logits = jnp.where(lane < nv, logits, -1e30)
    mx = jnp.max(logits, axis=-1, keepdims=True)
    e = jnp.where(lane < nv, jnp.exp(logits - mx), 0.0)
    w = e / jnp.sum(e, axis=-1, keepdims=True)         # exact softmax (matches torch)
    att_ref[...] = w                                   # (1, n_pad)
    pooled_ref[...] = jnp.dot(w, h, preferred_element_type=jnp.float32)  # (1, d)


def attn_pool_batched(x_stack, n_valid, att_w):
    s_act, n_pad, d = x_stack.shape
    idx3 = lambda s, nv: (s, 0, 0)
    blk = (n_pad * d * 4 + d * d * 2 + 4 * d * d + 4 * d * 4
           + d * 2 + d * 4 + n_pad * 4)
    # TODO(synk): for multi-thousand-node bags add an inner node-tile axis with
    # online softmax so the per-scale x block stays bounded on v7x's 64 MiB.
    pooled, att = pl.pallas_call(
        functools.partial(_attn_kernel, d=d),
        out_shape=(jax.ShapeDtypeStruct((s_act, 1, d), jnp.float32),
                   jax.ShapeDtypeStruct((s_act, 1, n_pad), jnp.float32)),
        grid_spec=pltpu.PrefetchScalarGridSpec(
            num_scalar_prefetch=1,
            grid=(s_act,),
            in_specs=[
                pl.BlockSpec((None, n_pad, d), idx3),      # x (per scale)
                pl.BlockSpec((None, d, d), idx3),          # att_l1 Wt (bf16)
                pl.BlockSpec((None, 1, d), idx3),          # att_l1 b
                pl.BlockSpec((None, d, 2 * d), idx3),      # [att1|att2] Wt (bf16)
                pl.BlockSpec((None, 1, 2 * d), idx3),      # [att1|att2] b
                pl.BlockSpec((None, 1, d), idx3),          # att3 W row (bf16)
                pl.BlockSpec((None, 1, 1), idx3),          # att3 b
            ],
            out_specs=(pl.BlockSpec((None, 1, d), idx3),
                       pl.BlockSpec((None, 1, n_pad), idx3))),
        compiler_params=pltpu.CompilerParams(
            dimension_semantics=("parallel",),
            vmem_limit_bytes=_vmem_limit(blk)),
    )(n_valid, x_stack, att_w["wl1t"], att_w["bl1"], att_w["w12t"],
      att_w["b12"], att_w["w3"], att_w["b3"])
    return pooled, att


# ---------------------------------------------------------------------------
# Head: (F.pad done in wrapper) -> l_last (Linear+LeakyReLU) -> l_cla (Linear+Sigmoid)
# M=1 and purely weight-streaming bound, so bf16 weights are the lever here.
# ---------------------------------------------------------------------------
def _head_kernel(xv_ref, w1_ref, b1_ref, w2_ref, b2_ref, o_ref):
    h = _leaky(jnp.dot(_bf16(xv_ref[...]), w1_ref[...],
                       preferred_element_type=jnp.float32) + b1_ref[...])
    o = jnp.dot(_bf16(h), w2_ref[...],
                preferred_element_type=jnp.float32) + b2_ref[...]
    o_ref[...] = jax.nn.sigmoid(o)


def head(x_v, w1t, b1, w2t, b2):
    out = w2t.shape[1]
    blk = (x_v.size * 4 + w1t.size * 2 + b1.size * 4
           + w2t.size * 2 + b2.size * 4 + out * 4)
    return pl.pallas_call(
        _head_kernel,
        out_shape=jax.ShapeDtypeStruct((1, out), jnp.float32),
        in_specs=[_VMEM] * 5,
        out_specs=_VMEM,
        compiler_params=pltpu.CompilerParams(vmem_limit_bytes=_vmem_limit(blk)),
    )(x_v, w1t, b1, w2t, b2)


# ---------------------------------------------------------------------------
# Glue (graph prep runs once, off the per-forward critical path)
# ---------------------------------------------------------------------------
def compute_pssz(feats_size_list, number_scale, using_Swin, magnification_scale):
    pssz = [0] * number_scale
    if using_Swin == 1:
        bag_count_sigle_layer = 1
        bag_count_idx = 0
        for i in range(number_scale):
            for _ in range(bag_count_sigle_layer):
                pssz[i] += feats_size_list[bag_count_idx]
                bag_count_idx += 1
            if i <= 0:
                bag_count_sigle_layer *= magnification_scale * magnification_scale
    else:
        for i in range(len(feats_size_list)):
            pssz[i] = feats_size_list[i]
    return pssz


def build_mean_adj(edge_index, num_nodes):
    # dense row-normalized adjacency (mean aggregation over incoming edges)
    src, dst = edge_index[0], edge_index[1]
    a = jnp.zeros((num_nodes, num_nodes), jnp.float32)
    a = a.at[dst, src].add(1.0)
    deg = jnp.sum(a, axis=1, keepdims=True)
    return jnp.where(deg > 0, a / jnp.maximum(deg, 1.0), 0.0)


def precompute_adjacencies(edge_index_diff, pssz, number_scale):
    # Graph topology is fixed per input: build the normalized adjacency once,
    # keep only the rows for the scale-(i+1) output nodes, split by input half
    # (scale-i columns / scale-(i+1) columns), stored bf16 for the MXU.
    adjs = {}
    rm = 0
    for i in range(number_scale):
        if pssz[i] < 16 and i > 0:
            break
        if i != number_scale - 1:
            p_lo, p_hi = pssz[i], pssz[i + 1]
            a = build_mean_adj(edge_index_diff[i] - rm, p_lo + p_hi)
            adjs[i] = (a[p_lo:, :p_lo].astype(jnp.bfloat16),
                       a[p_lo:, p_lo:].astype(jnp.bfloat16))
            rm += p_lo
    return adjs


def mil_forward(params, x, adjs, pssz, *, number_scale):
    d = params["l0_wt"].shape[1]
    # the torch code hard-pads to number_scale*512 before l_last
    assert params["llast_wt"].shape[0] == number_scale * 512, (
        "hardcoded F.pad target (number_scale*512) requires in_classes//2 == 512")

    # l0: Linear + LeakyReLU (+ Dropout == identity)
    x = l0_linear(x, params["l0_wt"], params["l0_b"])

    # per-scale graph convs.  conv i reads the scale-i rows already updated by
    # conv i-1 (true sequential dependency -> cannot batch the scale axis into
    # one parallel pallas_call); each conv only emits the scale-(i+1) rows that
    # feed downstream, so there is no dynamic_update_slice / full-x rewrite.
    x_att = []
    rm = 0
    prev = None          # updated scale-i rows = output of conv i-1
    for i in range(number_scale):
        if pssz[i] < 16 and i > 0:
            break
        cur = prev if prev is not None else x[:pssz[0]]
        x_att.append(cur)
        if i != number_scale - 1:
            x_hi = x[rm + pssz[i]: rm + pssz[i] + pssz[i + 1]]
            a_lo, a_hi = adjs[i]
            prev = gcn_conv(a_lo, a_hi, cur, x_hi, params["gcn"][i])
            rm += pssz[i]

    # batched gated-attention pooling over all active scales (one kernel);
    # node dim padded to a multiple of 128 so logits/softmax/att rows are
    # lane-dense (unmasked stores).
    s_act = len(x_att)
    n_sizes = [xs.shape[0] for xs in x_att]
    n_pad = max(128, ((max(n_sizes) + 127) // 128) * 128)
    # TODO(synk): zero-copy variant would io-alias the conv outputs straight
    # into this stack instead of wrapper-side pad+stack; kept simple here.
    x_stack = jnp.stack(
        [jnp.pad(xs, ((0, n_pad - xs.shape[0]), (0, 0))) for xs in x_att], axis=0)
    n_valid = jnp.asarray(n_sizes, dtype=jnp.int32)
    pooled, att = attn_pool_batched(x_stack, n_valid, params["att"])
    at_ = [att[i, :, :n_sizes[i]] for i in range(s_act)]   # (1, n_i) rows, no transpose

    # head: concat pooled feats, F.pad to number_scale*512, l_last, l_cla
    x_v = pooled.reshape(1, s_act * d)
    pad_to = params["llast_wt"].shape[0]
    if x_v.shape[1] < pad_to:
        x_v = jnp.pad(x_v, ((0, 0), (0, pad_to - x_v.shape[1])))
    x_v = head(x_v, params["llast_wt"], params["llast_b"],
               params["lcla_wt"], params["lcla_b"])
    return x_v, at_


# ---------------------------------------------------------------------------
# Main
# ---------------------------------------------------------------------------
if __name__ == "__main__":
    in_classes = 1024          # hardcoded pad to number_scale*512 implies in_classes//2 == 512
    out_classes = 2
    number_scale = 3
    n_gcn_layers = 1           # attention layers act on D * n_gcn_layers = D features
    using_Swin = 0
    magnification_scale = 2
    D = in_classes // 2        # 512

    feats_size_list = [16, 16, 16]
    N = sum(feats_size_list)

    keys = jax.random.split(jax.random.PRNGKey(0), 64)
    _k = iter(keys)

    def w(shape, scale=0.05):
        return jax.random.normal(next(_k), shape, jnp.float32) * scale

    bf = lambda a: a.astype(jnp.bfloat16)

    params = {
        "l0_wt": bf(w((in_classes, D))), "l0_b": w((1, D)),
        "gcn": [],
        "llast_wt": bf(w((D * number_scale, D * number_scale))),
        "llast_b": w((1, D * number_scale)),
        "lcla_wt": bf(w((D * number_scale, out_classes))),
        "lcla_b": w((1, out_classes)),
    }
    for _ in range(number_scale):
        params["gcn"].append({
            "wt": bf(w((D, D))), "b": w((1, D)),
            "gamma": jnp.ones((1, D), jnp.float32),
            "beta": jnp.zeros((1, D), jnp.float32),
        })

    # per-scale attention parameters, pre-stacked along a leading scale axis
    params["att"] = {
        "wl1t": bf(jnp.stack([w((D, D)) for _ in range(number_scale)])),
        "bl1": jnp.stack([w((1, D)) for _ in range(number_scale)]),
        "w12t": bf(jnp.stack([jnp.concatenate([w((D, D)), w((D, D))], axis=1)
                              for _ in range(number_scale)])),
        "b12": jnp.stack([jnp.concatenate([w((1, D)), w((1, D))], axis=1)
                          for _ in range(number_scale)]),
        "w3": bf(jnp.stack([w((1, D)) for _ in range(number_scale)])),
        "b3": jnp.stack([w((1, 1)) for _ in range(number_scale)]),
    }

    x = jax.random.normal(next(_k), (N, in_classes), jnp.float32)

    def ring_edges(num_nodes, offset):
        idx = jnp.arange(num_nodes, dtype=jnp.int32)
        src = jnp.concatenate([(idx - 1) % num_nodes, (idx + 1) % num_nodes])
        dst = jnp.concatenate([idx, idx])
        return jnp.stack([src, dst], axis=0) + offset

    # conv i operates on the concatenation of scale i and i+1 nodes (32 nodes)
    edge_index_diff = [ring_edges(32, 0), ring_edges(32, 16)]

    pssz = compute_pssz(feats_size_list, number_scale, using_Swin,
                        magnification_scale)
    adjs = precompute_adjacencies(edge_index_diff, pssz, number_scale)

    x_v, at_ = mil_forward(params, x, adjs, pssz, number_scale=number_scale)
    jax.block_until_ready(x_v)
    jax.block_until_ready(at_)
    assert x_v.shape == (1, out_classes)
    assert all(a.shape == (1, n) for a, n in zip(at_, feats_size_list))
    print("KERNEL_OK")
</pallas_src>

<mosaic_0001>
module attributes {stable_mosaic.version = 11 : i64} {
  func.func @_l0_kernel(%arg0: i32, %arg1: memref<48x1024xf32, #tpu.memory_space<vmem>>, %arg2: memref<1024x512xbf16, #tpu.memory_space<vmem>>, %arg3: memref<1x512xf32, #tpu.memory_space<vmem>>, %arg4: memref<48x512xf32, #tpu.memory_space<vmem>>) attributes {dimension_semantics = [#tpu.dimension_semantics<parallel>], iteration_bounds = array<i64: 1>, scalar_prefetch = 0 : i64, scratch_operands = 0 : i64, tpu.core_type = #tpu.core_type<tc>, window_params = [{transform_indices = @transform_0, window_bounds = array<i64: 48, 1024>}, {pipeline_mode = #tpu.pipeline_mode<synchronous>, transform_indices = @transform_1, window_bounds = array<i64: 1024, 512>}, {pipeline_mode = #tpu.pipeline_mode<synchronous>, transform_indices = @transform_2, window_bounds = array<i64: 1, 512>}, {transform_indices = @transform_3, window_bounds = array<i64: 48, 512>}]} {
    %c0 = arith.constant 0 : index
    %c0_0 = arith.constant 0 : index
    %0 = vector.load %arg1[%c0, %c0_0] : memref<48x1024xf32, #tpu.memory_space<vmem>>, vector<48x1024xf32>
    %1 = arith.truncf %0 : vector<48x1024xf32> to vector<48x1024xbf16>
    %c0_1 = arith.constant 0 : index
    %c0_2 = arith.constant 0 : index
    %2 = vector.load %arg2[%c0_1, %c0_2] : memref<1024x512xbf16, #tpu.memory_space<vmem>>, vector<1024x512xbf16>
    %cst = arith.constant dense<0.000000e+00> : vector<48x512xf32>
    %3 = tpu.matmul %1, %2, %cst {dimension_numbers = #tpu.dot_dimension_numbers<[1], [0], [0], [1], [0, 0, 1, 1], [], []>} : vector<48x1024xbf16>, vector<1024x512xbf16>, vector<48x512xf32> -> vector<48x512xf32>
    %c0_3 = arith.constant 0 : index
    %c0_4 = arith.constant 0 : index
    %4 = vector.load %arg3[%c0_3, %c0_4] : memref<1x512xf32, #tpu.memory_space<vmem>>, vector<1x512xf32>
    %5 = vector.broadcast %4 : vector<1x512xf32> to vector<48x512xf32>
    %6 = arith.addf %3, %5 : vector<48x512xf32>
    %cst_5 = arith.constant 0.000000e+00 : f32
    %7 = vector.broadcast %cst_5 : f32 to vector<48x512xf32>
    %8 = arith.cmpf oge, %6, %7 : vector<48x512xf32>
    %cst_6 = arith.constant 0.00999999977 : f32
    %9 = vector.broadcast %cst_6 : f32 to vector<48x512xf32>
    %10 = arith.mulf %9, %6 : vector<48x512xf32>
    %11 = arith.select %8, %6, %10 : vector<48x512xi1>, vector<48x512xf32>
    %c0_7 = arith.constant 0 : index
    %c0_8 = arith.constant 0 : index
    %12 = vector.load %arg4[%c0_7, %c0_8] : memref<48x512xf32, #tpu.memory_space<vmem>>, vector<48x512xf32>
    tpu.vector_store %arg4[%c0_7, %c0_8], %11 {strides = array<i32>} : memref<48x512xf32, #tpu.memory_space<vmem>>, vector<48x512xf32>,
    return
  }
  func.func @transform_0(%arg0: i32) -> (i32, i32) {
    %c0_i32 = arith.constant 0 : i32
    %c0_i32_0 = arith.constant 0 : i32
    return %arg0, %c0_i32 : i32, i32
  }
  func.func @transform_1(%arg0: i32) -> (i32, i32) {
    %c0_i32 = arith.constant 0 : i32
    %c0_i32_0 = arith.constant 0 : i32
    %c0_i32_1 = arith.constant 0 : i32
    return %c0_i32, %c0_i32_0 : i32, i32
  }
  func.func @transform_2(%arg0: i32) -> (i32, i32) {
    %c0_i32 = arith.constant 0 : i32
    %c0_i32_0 = arith.constant 0 : i32
    %c0_i32_1 = arith.constant 0 : i32
    return %c0_i32, %c0_i32_0 : i32, i32
  }
  func.func @transform_3(%arg0: i32) -> (i32, i32) {
    %c0_i32 = arith.constant 0 : i32
    %c0_i32_0 = arith.constant 0 : i32
    return %arg0, %c0_i32 : i32, i32
  }
}

</mosaic_0001>

<llo_original>
// kernel: tpu_custom_call.1
$region0: #{tpu_custom_call.1}
  #allocation0 [shape = 'u32[]', space=smem, size = 0x4, offset = 0x4, fixed_abs, tag = 'smem constant byte address 0x4 - core index']
  #allocation1 [shape = 'u32[144,128]{1,0:T(1,128)}', space=vmem, size = 0x12000, scoped, tag = 'internal scratch']
  %s0 = inlined_call_operand.hbm [shape: f32[48,1024], index: 0, kind: input, shape index: {}]
  %s1 = inlined_call_operand.hbm [shape: bf16[1024,512], index: 1, kind: input, shape index: {}]
  %s2 = inlined_call_operand.vmem [shape: f32[1,512], index: 2, kind: input, shape index: {}]
  %s3 = inlined_call_operand.hbm [shape: f32[48,512], index: 3, kind: output, shape index: {}]
  %s4 = sld [smem:[#allocation0]]
  $region30: #{tpu_custom_call.1} parent=0
    _
  %s6 = ssub.s32 1, %s4
  %s7 = scalar_select 0, %s6, %s4
  $region1: #{tpu_custom_call.1} parent=0
    #allocation2 [shape = 'u8[196608]{0}', space=vmem, size = 0x30000, scoped, tag = 'input window, operand 0, single buffered']
    #allocation3 [shape = 's32[1]{0}', space=sflag, size = 0x4, scoped, tag = 'scoped memory for tpu_custom_call.1']
    #allocation4 [shape = 's32[1]{0}', space=sflag, size = 0x4, scoped, tag = 'scoped memory for tpu_custom_call.1']
    #allocation5 [shape = 'u8[1048576]{0}', space=vmem, size = 0x100000, scoped, tag = 'input window, operand 1, single buffered']
    #allocation6 [shape = 's32[1]{0}', space=sflag, size = 0x4, scoped, tag = 'scoped memory for tpu_custom_call.1']
    #allocation7 [shape = 'u8[98304]{0}', space=vmem, size = 0x18000, scoped, tag = 'output window, operand 0, single buffered']
    %8 = vsyncpa [#allocation3], 0
    %9 = vsyncpa [#allocation6], 0
    %10 = vsyncpa [#allocation4], 0
    // Predicated region
    $region2: #{tpu_custom_call.1} parent=1 // pred_check
      _
    $region3: #{tpu_custom_call.1} parent=1 // pred_check_branch
      %12 = sbr.rel (0) target = $region5
    $region4: #{tpu_custom_call.1} parent=1 // pred_region
      %s14 = ssub.s32 6144, 6144
      %15 = vsyncadd [#allocation3], %s14
      %s16 = sshll.u32 [#allocation2], 4
      %s17 = int_to_ptr.vmem [resolvable:$true] %s16
      %22 = dma.hbm_to_vmem [thread:$0]  %s0, 6144, %s17, [#allocation3], 1024, 1024, 64
    $region5: #{tpu_custom_call.1} parent=1 // pred_fallthru
      _
    // Predicated region
    $region6: #{tpu_custom_call.1} parent=1 // pred_check
      _
    $region7: #{tpu_custom_call.1} parent=1 // pred_check_branch
      %24 = sbr.rel (0) target = $region9
    $region8: #{tpu_custom_call.1} parent=1 // pred_region
      %s26 = ssub.s32 32768, 32768
      %27 = vsyncadd [#allocation6], %s26
      %s28 = sshll.u32 [#allocation5], 4
      %s29 = int_to_ptr.vmem [resolvable:$true] %s28
      %34 = dma.hbm_to_vmem [thread:$0]  %s1, 32768, %s29, [#allocation6], 256, 256, 16
    $region9: #{tpu_custom_call.1} parent=1 // pred_fallthru
      _
    // Predicated region
    $region10: #{tpu_custom_call.1} parent=1 // pred_check
      _
    $region11: #{tpu_custom_call.1} parent=1 // pred_check_branch
      %36 = sbr.rel (0) target = $region13
    $region12: #{tpu_custom_call.1} parent=1 // pred_region
      _
    $region13: #{tpu_custom_call.1} parent=1 // pred_fallthru
      _
    // Predicated region
    $region14: #{tpu_custom_call.1} parent=1 // pred_check
      _
    $region15: #{tpu_custom_call.1} parent=1 // pred_check_branch
      %38 = sbr.rel (0) target = $region17
    $region16: #{tpu_custom_call.1} parent=1 // pred_region
      %39 = dma.done [#allocation3], 6144
    $region17: #{tpu_custom_call.1} parent=1 // pred_fallthru
      _
    // Predicated region
    $region18: #{tpu_custom_call.1} parent=1 // pred_check
      _
    $region19: #{tpu_custom_call.1} parent=1 // pred_check_branch
      %41 = sbr.rel (0) target = $region21
    $region20: #{tpu_custom_call.1} parent=1 // pred_region
      %42 = dma.done [#allocation6], 32768
    $region21: #{tpu_custom_call.1} parent=1 // pred_fallthru
      _
    %v43 = vld [vmem:[#allocation2] sm:$0xff]
    %v44 = vld [vmem:[#allocation2 + $0x8] sm:$0xff]
    %v45 = vld [vmem:[#allocation2 + $0x10] sm:$0xff]
    %v46 = vld [vmem:[#allocation2 + $0x18] sm:$0xff]
    %v47 = vld [vmem:[#allocation2 + $0x20] sm:$0xff]
    %v48 = vld [vmem:[#allocation2 + $0x28] sm:$0xff]
    %v49 = vld [vmem:[#allocation2 + $0x30] sm:$0xff]
    %v50 = vld [vmem:[#allocation2 + $0x38] sm:$0xff]
    %v51 = vld [vmem:[#allocation2 + $0x40] sm:$0xff]
    %v52 = vld [vmem:[#allocation2 + $0x48] sm:$0xff]
    %v53 = vld [vmem:[#allocation2 + $0x50] sm:$0xff]
    %v54 = vld [vmem:[#allocation2 + $0x58] sm:$0xff]
    %v55 = vld [vmem:[#allocation2 + $0x60] sm:$0xff]
    %v56 = vld [vmem:[#allocation2 + $0x68] sm:$0xff]
    %v57 = vld [vmem:[#allocation2 + $0x70] sm:$0xff]
    %v58 = vld [vmem:[#allocation2 + $0x78] sm:$0xff]
    %v59 = vld [vmem:[#allocation2 + $0x80] sm:$0xff]
    %v60 = vld [vmem:[#allocation2 + $0x88] sm:$0xff]
    %v61 = vld [vmem:[#allocation2 + $0x90] sm:$0xff]
    %v62 = vld [vmem:[#allocation2 + $0x98] sm:$0xff]
    %v63 = vld [vmem:[#allocation2 + $0xa0] sm:$0xff]
    %v64 = vld [vmem:[#allocation2 + $0xa8] sm:$0xff]
    %v65 = vld [vmem:[#allocation2 + $0xb0] sm:$0xff]
    %v66 = vld [vmem:[#allocation2 + $0xb8] sm:$0xff]
    %v67 = vld [vmem:[#allocation2 + $0xc0] sm:$0xff]
    %v68 = vld [vmem:[#allocation2 + $0xc8] sm:$0xff]
    %v69 = vld [vmem:[#allocation2 + $0xd0] sm:$0xff]
    %v70 = vld [vmem:[#allocation2 + $0xd8] sm:$0xff]
    %v71 = vld [vmem:[#allocation2 + $0xe0] sm:$0xff]
    %v72 = vld [vmem:[#allocation2 + $0xe8] sm:$0xff]
    %v73 = vld [vmem:[#allocation2 + $0xf0] sm:$0xff]
    %v74 = vld [vmem:[#allocation2 + $0xf8] sm:$0xff]
    %v75 = vld [vmem:[#allocation2 + $0x100] sm:$0xff]
    %v76 = vld [vmem:[#allocation2 + $0x108] sm:$0xff]
    %v77 = vld [vmem:[#allocation2 + $0x110] sm:$0xff]
    %v78 = vld [vmem:[#allocation2 + $0x118] sm:$0xff]
    %v79 = vld [vmem:[#allocation2 + $0x120] sm:$0xff]
    %v80 = vld [vmem:[#allocation2 + $0x128] sm:$0xff]
    %v81 = vld [vmem:[#allocation2 + $0x130] sm:$0xff]
    %v82 = vld [vmem:[#allocation2 + $0x138] sm:$0xff]
    %v83 = vld [vmem:[#allocation2 + $0x140] sm:$0xff]
    %v84 = vld [vmem:[#allocation2 + $0x148] sm:$0xff]
    %v85 = vld [vmem:[#allocation2 + $0x150] sm:$0xff]
    %v86 = vld [vmem:[#allocation2 + $0x158] sm:$0xff]
    %v87 = vld [vmem:[#allocation2 + $0x160] sm:$0xff]
    %v88 = vld [vmem:[#allocation2 + $0x168] sm:$0xff]
    %v89 = vld [vmem:[#allocation2 + $0x170] sm:$0xff]
    %v90 = vld [vmem:[#allocation2 + $0x178] sm:$0xff]
    %v91 = vpack.c.bf16 %v51, %v43
    %v92 = vpack.c.bf16 %v52, %v44
    %v93 = vpack.c.bf16 %v53, %v45
    %v94 = vpack.c.bf16 %v54, %v46
    %v95 = vpack.c.bf16 %v55, %v47
    %v96 = vpack.c.bf16 %v56, %v48
    %v97 = vpack.c.bf16 %v57, %v49
    %v98 = vpack.c.bf16 %v58, %v50
    %v99 = vpack.c.bf16 %v67, %v59
    %v100 = vpack.c.bf16 %v68, %v60
    %v101 = vpack.c.bf16 %v69, %v61
    %v102 = vpack.c.bf16 %v70, %v62
    %v103 = vpack.c.bf16 %v71, %v63
    %v104 = vpack.c.bf16 %v72, %v64
    %v105 = vpack.c.bf16 %v73, %v65
    %v106 = vpack.c.bf16 %v74, %v66
    %v107 = vpack.c.bf16 %v83, %v75
    %v108 = vpack.c.bf16 %v84, %v76
    %v109 = vpack.c.bf16 %v85, %v77
    %v110 = vpack.c.bf16 %v86, %v78
    %v111 = vpack.c.bf16 %v87, %v79
    %v112 = vpack.c.bf16 %v88, %v80
    %v113 = vpack.c.bf16 %v89, %v81
    %v114 = vpack.c.bf16 %v90, %v82
    %v115 = vld [vmem:[#allocation5] sm:$0xff]
    %v116 = vld [vmem:[#allocation5 + $0x8] sm:$0xff]
    %v117 = vld [vmem:[#allocation5 + $0x10] sm:$0xff]
    %v118 = vld [vmem:[#allocation5 + $0x18] sm:$0xff]
    %v119 = vld [vmem:[#allocation5 + $0x20] sm:$0xff]
    %v120 = vld [vmem:[#allocation5 + $0x28] sm:$0xff]
    %v121 = vld [vmem:[#allocation5 + $0x30] sm:$0xff]
    %v122 = vld [vmem:[#allocation5 + $0x38] sm:$0xff]
    %v123 = vld [vmem:[#allocation5 + $0x40] sm:$0xff]
    %v124 = vld [vmem:[#allocation5 + $0x48] sm:$0xff]
    %v125 = vld [vmem:[#allocation5 + $0x50] sm:$0xff]
    %v126 = vld [vmem:[#allocation5 + $0x58] sm:$0xff]
    %v127 = vld [vmem:[#allocation5 + $0x60] sm:$0xff]
    %v128 = vld [vmem:[#allocation5 + $0x68] sm:$0xff]
    %v129 = vld [vmem:[#allocation5 + $0x70] sm:$0xff]
    %v130 = vld [vmem:[#allocation5 + $0x78] sm:$0xff]
    %v131 = vld [vmem:[#allocation5 + $0x80] sm:$0xff]
    %v132 = vld [vmem:[#allocation5 + $0x88] sm:$0xff]
    %v133 = vld [vmem:[#allocation5 + $0x90] sm:$0xff]
    %v134 = vld [vmem:[#allocation5 + $0x98] sm:$0xff]
    %v135 = vld [vmem:[#allocation5 + $0xa0] sm:$0xff]
    %v136 = vld [vmem:[#allocation5 + $0xa8] sm:$0xff]
    %v137 = vld [vmem:[#allocation5 + $0xb0] sm:$0xff]
    %v138 = vld [vmem:[#allocation5 + $0xb8] sm:$0xff]
    %v139 = vld [vmem:[#allocation5 + $0xc0] sm:$0xff]
    %v140 = vld [vmem:[#allocation5 + $0xc8] sm:$0xff]
    %v141 = vld [vmem:[#allocation5 + $0xd0] sm:$0xff]
    %v142 = vld [vmem:[#allocation5 + $0xd8] sm:$0xff]
    %v143 = vld [vmem:[#allocation5 + $0xe0] sm:$0xff]
    %v144 = vld [vmem:[#allocation5 + $0xe8] sm:$0xff]
    %v145 = vld [vmem:[#allocation5 + $0xf0] sm:$0xff]
    %v146 = vld [vmem:[#allocation5 + $0xf8] sm:$0xff]
    %v147 = vld [vmem:[#allocation5 + $0x100] sm:$0xff]
    %v148 = vld [vmem:[#allocation5 + $0x108] sm:$0xff]
    %v149 = vld [vmem:[#allocation5 + $0x110] sm:$0xff]
    %v150 = vld [vmem:[#allocation5 + $0x118] sm:$0xff]
    %v151 = vld [vmem:[#allocation5 + $0x120] sm:$0xff]
    %v152 = vld [vmem:[#allocation5 + $0x128] sm:$0xff]
    %v153 = vld [vmem:[#allocation5 + $0x130] sm:$0xff]
    %v154 = vld [vmem:[#allocation5 + $0x138] sm:$0xff]
    %v155 = vld [vmem:[#allocation5 + $0x140] sm:$0xff]
    %v156 = vld [vmem:[#allocation5 + $0x148] sm:$0xff]
    %v157 = vld [vmem:[#allocation5 + $0x150] sm:$0xff]
    %v158 = vld [vmem:[#allocation5 + $0x158] sm:$0xff]
    %v159 = vld [vmem:[#allocation5 + $0x160] sm:$0xff]
    %v160 = vld [vmem:[#allocation5 + $0x168] sm:$0xff]
    %v161 = vld [vmem:[#allocation5 + $0x170] sm:$0xff]
    %v162 = vld [vmem:[#allocation5 + $0x178] sm:$0xff]
    %v163 = vld [vmem:[#allocation5 + $0x180] sm:$0xff]
    %v164 = vld [vmem:[#allocation5 + $0x188] sm:$0xff]
    %v165 = vld [vmem:[#allocation5 + $0x190] sm:$0xff]
    %v166 = vld [vmem:[#allocation5 + $0x198] sm:$0xff]
    %v167 = vld [vmem:[#allocation5 + $0x1a0] sm:$0xff]
    %v168 = vld [vmem:[#allocation5 + $0x1a8] sm:$0xff]
    %v169 = vld [vmem:[#allocation5 + $0x1b0] sm:$0xff]
    %v170 = vld [vmem:[#allocation5 + $0x1b8] sm:$0xff]
    %v171 = vld [vmem:[#allocation5 + $0x1c0] sm:$0xff]
    %v172 = vld [vmem:[#allocation5 + $0x1c8] sm:$0xff]
    %v173 = vld [vmem:[#allocation5 + $0x1d0] sm:$0xff]
    %v174 = vld [vmem:[#allocation5 + $0x1d8] sm:$0xff]
    %v175 = vld [vmem:[#allocation5 + $0x1e0] sm:$0xff]
    %v176 = vld [vmem:[#allocation5 + $0x1e8] sm:$0xff]
    %v177 = vld [vmem:[#allocation5 + $0x1f0] sm:$0xff]
    %v178 = vld [vmem:[#allocation5 + $0x1f8] sm:$0xff]
    %v179 = vld [vmem:[#allocation5 + $0x200] sm:$0xff]
    %v180 = vld [vmem:[#allocation5 + $0x208] sm:$0xff]
    %v181 = vld [vmem:[#allocation5 + $0x210] sm:$0xff]
    %v182 = vld [vmem:[#allocation5 + $0x218] sm:$0xff]
    %v183 = vld [vmem:[#allocation5 + $0x220] sm:$0xff]
    %v184 = vld [vmem:[#allocation5 + $0x228] sm:$0xff]
    %v185 = vld [vmem:[#allocation5 + $0x230] sm:$0xff]
    %v186 = vld [vmem:[#allocation5 + $0x238] sm:$0xff]
    %v187 = vld [vmem:[#allocation5 + $0x240] sm:$0xff]
    %v188 = vld [vmem:[#allocation5 + $0x248] sm:$0xff]
    %v189 = vld [vmem:[#allocation5 + $0x250] sm:$0xff]
    %v190 = vld [vmem:[#allocation5 + $0x258] sm:$0xff]
    %v191 = vld [vmem:[#allocation5 + $0x260] sm:$0xff]
    %v192 = vld [vmem:[#allocation5 + $0x268] sm:$0xff]
    %v193 = vld [vmem:[#allocation5 + $0x270] sm:$0xff]
    %v194 = vld [vmem:[#allocation5 + $0x278] sm:$0xff]
    %v195 = vld [vmem:[#allocation5 + $0x280] sm:$0xff]
    %v196 = vld [vmem:[#allocation5 + $0x288] sm:$0xff]
    %v197 = vld [vmem:[#allocation5 + $0x290] sm:$0xff]
    %v198 = vld [vmem:[#allocation5 + $0x298] sm:$0xff]
    %v199 = vld [vmem:[#allocation5 + $0x2a0] sm:$0xff]
    %v200 = vld [vmem:[#allocation5 + $0x2a8] sm:$0xff]
    %v201 = vld [vmem:[#allocation5 + $0x2b0] sm:$0xff]
    %v202 = vld [vmem:[#allocation5 + $0x2b8] sm:$0xff]
    %v203 = vld [vmem:[#allocation5 + $0x2c0] sm:$0xff]
    %v204 = vld [vmem:[#allocation5 + $0x2c8] sm:$0xff]
    %v205 = vld [vmem:[#allocation5 + $0x2d0] sm:$0xff]
    %v206 = vld [vmem:[#allocation5 + $0x2d8] sm:$0xff]
    %v207 = vld [vmem:[#allocation5 + $0x2e0] sm:$0xff]
    %v208 = vld [vmem:[#allocation5 + $0x2e8] sm:$0xff]
    %v209 = vld [vmem:[#allocation5 + $0x2f0] sm:$0xff]
    %v210 = vld [vmem:[#allocation5 + $0x2f8] sm:$0xff]
    %v211 = vld [vmem:[#allocation5 + $0x300] sm:$0xff]
    %v212 = vld [vmem:[#allocation5 + $0x308] sm:$0xff]
    %v213 = vld [vmem:[#allocation5 + $0x310] sm:$0xff]
    %v214 = vld [vmem:[#allocation5 + $0x318] sm:$0xff]
    %v215 = vld [vmem:[#allocation5 + $0x320] sm:$0xff]
    %v216 = vld [vmem:[#allocation5 + $0x328] sm:$0xff]
    %v217 = vld [vmem:[#allocation5 + $0x330] sm:$0xff]
    %v218 = vld [vmem:[#allocation5 + $0x338] sm:$0xff]
    %v219 = vld [vmem:[#allocation5 + $0x340] sm:$0xff]
    %v220 = vld [vmem:[#allocation5 + $0x348] sm:$0xff]
    %v221 = vld [vmem:[#allocation5 + $0x350] sm:$0xff]
    %v222 = vld [vmem:[#allocation5 + $0x358] sm:$0xff]
    %v223 = vld [vmem:[#allocation5 + $0x360] sm:$0xff]
    %v224 = vld [vmem:[#allocation5 + $0x368] sm:$0xff]
    %v225 = vld [vmem:[#allocation5 + $0x370] sm:$0xff]
    %v226 = vld [vmem:[#allocation5 + $0x378] sm:$0xff]
    %v227 = vld [vmem:[#allocation5 + $0x380] sm:$0xff]
    %v228 = vld [vmem:[#allocation5 + $0x388] sm:$0xff]
    %v229 = vld [vmem:[#allocation5 + $0x390] sm:$0xff]
    %v230 = vld [vmem:[#allocation5 + $0x398] sm:$0xff]
    %v231 = vld [vmem:[#allocation5 + $0x3a0] sm:$0xff]
    %v232 = vld [vmem:[#allocation5 + $0x3a8] sm:$0xff]
    %v233 = vld [vmem:[#allocation5 + $0x3b0] sm:$0xff]
    %v234 = vld [vmem:[#allocation5 + $0x3b8] sm:$0xff]
    %v235 = vld [vmem:[#allocation5 + $0x3c0] sm:$0xff]
    %v236 = vld [vmem:[#allocation5 + $0x3c8] sm:$0xff]
    %v237 = vld [vmem:[#allocation5 + $0x3d0] sm:$0xff]
    %v238 = vld [vmem:[#allocation5 + $0x3d8] sm:$0xff]
    %v239 = vld [vmem:[#allocation5 + $0x3e0] sm:$0xff]
    %v240 = vld [vmem:[#allocation5 + $0x3e8] sm:$0xff]
    %v241 = vld [vmem:[#allocation5 + $0x3f0] sm:$0xff]
    %v242 = vld [vmem:[#allocation5 + $0x3f8] sm:$0xff]
    %v243 = vld [vmem:[#allocation5 + $0x400] sm:$0xff]
    %v244 = vld [vmem:[#allocation5 + $0x408] sm:$0xff]
    %v245 = vld [vmem:[#allocation5 + $0x410] sm:$0xff]
    %v246 = vld [vmem:[#allocation5 + $0x418] sm:$0xff]
    %v247 = vld [vmem:[#allocation5 + $0x420] sm:$0xff]
    %v248 = vld [vmem:[#allocation5 + $0x428] sm:$0xff]
    %v249 = vld [vmem:[#allocation5 + $0x430] sm:$0xff]
    %v250 = vld [vmem:[#allocation5 + $0x438] sm:$0xff]
    %v251 = vld [vmem:[#allocation5 + $0x440] sm:$0xff]
    %v252 = vld [vmem:[#allocation5 + $0x448] sm:$0xff]
    %v253 = vld [vmem:[#allocation5 + $0x450] sm:$0xff]
    %v254 = vld [vmem:[#allocation5 + $0x458] sm:$0xff]
    %v255 = vld [vmem:[#allocation5 + $0x460] sm:$0xff]
    %v256 = vld [vmem:[#allocation5 + $0x468] sm:$0xff]
    %v257 = vld [vmem:[#allocation5 + $0x470] sm:$0xff]
    %v258 = vld [vmem:[#allocation5 + $0x478] sm:$0xff]
    %v259 = vld [vmem:[#allocation5 + $0x480] sm:$0xff]
    %v260 = vld [vmem:[#allocation5 + $0x488] sm:$0xff]
    %v261 = vld [vmem:[#allocation5 + $0x490] sm:$0xff]
    %v262 = vld [vmem:[#allocation5 + $0x498] sm:$0xff]
    %v263 = vld [vmem:[#allocation5 + $0x4a0] sm:$0xff]
    %v264 = vld [vmem:[#allocation5 + $0x4a8] sm:$0xff]
    %v265 = vld [vmem:[#allocation5 + $0x4b0] sm:$0xff]
    %v266 = vld [vmem:[#allocation5 + $0x4b8] sm:$0xff]
    %v267 = vld [vmem:[#allocation5 + $0x4c0] sm:$0xff]
    %v268 = vld [vmem:[#allocation5 + $0x4c8] sm:$0xff]
    %v269 = vld [vmem:[#allocation5 + $0x4d0] sm:$0xff]
    %v270 = vld [vmem:[#allocation5 + $0x4d8] sm:$0xff]
    %v271 = vld [vmem:[#allocation5 + $0x4e0] sm:$0xff]
    %v272 = vld [vmem:[#allocation5 + $0x4e8] sm:$0xff]
    %v273 = vld [vmem:[#allocation5 + $0x4f0] sm:$0xff]
    %v274 = vld [vmem:[#allocation5 + $0x4f8] sm:$0xff]
    %v275 = vld [vmem:[#allocation5 + $0x500] sm:$0xff]
    %v276 = vld [vmem:[#allocation5 + $0x508] sm:$0xff]
    %v277 = vld [vmem:[#allocation5 + $0x510] sm:$0xff]
    %v278 = vld [vmem:[#allocation5 + $0x518] sm:$0xff]
    %v279 = vld [vmem:[#allocation5 + $0x520] sm:$0xff]
    %v280 = vld [vmem:[#allocation5 + $0x528] sm:$0xff]
    %v281 = vld [vmem:[#allocation5 + $0x530] sm:$0xff]
    %v282 = vld [vmem:[#allocation5 + $0x538] sm:$0xff]
    %v283 = vld [vmem:[#allocation5 + $0x540] sm:$0xff]
    %v284 = vld [vmem:[#allocation5 + $0x548] sm:$0xff]
    %v285 = vld [vmem:[#allocation5 + $0x550] sm:$0xff]
    %v286 = vld [vmem:[#allocation5 + $0x558] sm:$0xff]
    %v287 = vld [vmem:[#allocation5 + $0x560] sm:$0xff]
    %v288 = vld [vmem:[#allocation5 + $0x568] sm:$0xff]
    %v289 = vld [vmem:[#allocation5 + $0x570] sm:$0xff]
    %v290 = vld [vmem:[#allocation5 + $0x578] sm:$0xff]
    %v291 = vld [vmem:[#allocation5 + $0x580] sm:$0xff]
    %v292 = vld [vmem:[#allocation5 + $0x588] sm:$0xff]
    %v293 = vld [vmem:[#allocation5 + $0x590] sm:$0xff]
    %v294 = vld [vmem:[#allocation5 + $0x598] sm:$0xff]
    %v295 = vld [vmem:[#allocation5 + $0x5a0] sm:$0xff]
    %v296 = vld [vmem:[#allocation5 + $0x5a8] sm:$0xff]
    %v297 = vld [vmem:[#allocation5 + $0x5b0] sm:$0xff]
    %v298 = vld [vmem:[#allocation5 + $0x5b8] sm:$0xff]
    %v299 = vld [vmem:[#allocation5 + $0x5c0] sm:$0xff]
    %v300 = vld [vmem:[#allocation5 + $0x5c8] sm:$0xff]
    %v301 = vld [vmem:[#allocation5 + $0x5d0] sm:$0xff]
    %v302 = vld [vmem:[#allocation5 + $0x5d8] sm:$0xff]
    %v303 = vld [vmem:[#allocation5 + $0x5e0] sm:$0xff]
    %v304 = vld [vmem:[#allocation5 + $0x5e8] sm:$0xff]
    %v305 = vld [vmem:[#allocation5 + $0x5f0] sm:$0xff]
    %v306 = vld [vmem:[#allocation5 + $0x5f8] sm:$0xff]
    %v307 = vld [vmem:[#allocation5 + $0x600] sm:$0xff]
    %v308 = vld [vmem:[#allocation5 + $0x608] sm:$0xff]
    %v309 = vld [vmem:[#allocation5 + $0x610] sm:$0xff]
    %v310 = vld [vmem:[#allocation5 + $0x618] sm:$0xff]
    %v311 = vld [vmem:[#allocation5 + $0x620] sm:$0xff]
    %v312 = vld [vmem:[#allocation5 + $0x628] sm:$0xff]
    %v313 = vld [vmem:[#allocation5 + $0x630] sm:$0xff]
    %v314 = vld [vmem:[#allocation5 + $0x638] sm:$0xff]
    %v315 = vld [vmem:[#allocation5 + $0x640] sm:$0xff]
    %v316 = vld [vmem:[#allocation5 + $0x648] sm:$0xff]
    %v317 = vld [vmem:[#allocation5 + $0x650] sm:$0xff]
    %v318 = vld [vmem:[#allocation5 + $0x658] sm:$0xff]
    %v319 = vld [vmem:[#allocation5 + $0x660] sm:$0xff]
    %v320 = vld [vmem:[#allocation5 + $0x668] sm:$0xff]
    %v321 = vld [vmem:[#allocation5 + $0x670] sm:$0xff]
    %v322 = vld [vmem:[#allocation5 + $0x678] sm:$0xff]
    %v323 = vld [vmem:[#allocation5 + $0x680] sm:$0xff]
    %v324 = vld [vmem:[#allocation5 + $0x688] sm:$0xff]
    %v325 = vld [vmem:[#allocation5 + $0x690] sm:$0xff]
    %v326 = vld [vmem:[#allocation5 + $0x698] sm:$0xff]
    %v327 = vld [vmem:[#allocation5 + $0x6a0] sm:$0xff]
    %v328 = vld [vmem:[#allocation5 + $0x6a8] sm:$0xff]
    %v329 = vld [vmem:[#allocation5 + $0x6b0] sm:$0xff]
    %v330 = vld [vmem:[#allocation5 + $0x6b8] sm:$0xff]
    %v331 = vld [vmem:[#allocation5 + $0x6c0] sm:$0xff]
    %v332 = vld [vmem:[#allocation5 + $0x6c8] sm:$0xff]
    %v333 = vld [vmem:[#allocation5 + $0x6d0] sm:$0xff]
    %v334 = vld [vmem:[#allocation5 + $0x6d8] sm:$0xff]
    %v335 = vld [vmem:[#allocation5 + $0x6e0] sm:$0xff]
    %v336 = vld [vmem:[#allocation5 + $0x6e8] sm:$0xff]
    %v337 = vld [vmem:[#allocation5 + $0x6f0] sm:$0xff]
    %v338 = vld [vmem:[#allocation5 + $0x6f8] sm:$0xff]
    %v339 = vld [vmem:[#allocation5 + $0x700] sm:$0xff]
    %v340 = vld [vmem:[#allocation5 + $0x708] sm:$0xff]
    %v341 = vld [vmem:[#allocation5 + $0x710] sm:$0xff]
    %v342 = vld [vmem:[#allocation5 + $0x718] sm:$0xff]
    %v343 = vld [vmem:[#allocation5 + $0x720] sm:$0xff]
    %v344 = vld [vmem:[#allocation5 + $0x728] sm:$0xff]
    %v345 = vld [vmem:[#allocation5 + $0x730] sm:$0xff]
    %v346 = vld [vmem:[#allocation5 + $0x738] sm:$0xff]
    %v347 = vld [vmem:[#allocation5 + $0x740] sm:$0xff]
    %v348 = vld [vmem:[#allocation5 + $0x748] sm:$0xff]
    %v349 = vld [vmem:[#allocation5 + $0x750] sm:$0xff]
    %v350 = vld [vmem:[#allocation5 + $0x758] sm:$0xff]
    %v351 = vld [vmem:[#allocation5 + $0x760] sm:$0xff]
    %v352 = vld [vmem:[#allocation5 + $0x768] sm:$0xff]
    %v353 = vld [vmem:[#allocation5 + $0x770] sm:$0xff]
    %v354 = vld [vmem:[#allocation5 + $0x778] sm:$0xff]
    %v355 = vld [vmem:[#allocation5 + $0x780] sm:$0xff]
    %v356 = vld [vmem:[#allocation5 + $0x788] sm:$0xff]
    %v357 = vld [vmem:[#allocation5 + $0x790] sm:$0xff]
    %v358 = vld [vmem:[#allocation5 + $0x798] sm:$0xff]
    %v359 = vld [vmem:[#allocation5 + $0x7a0] sm:$0xff]
    %v360 = vld [vmem:[#allocation5 + $0x7a8] sm:$0xff]
    %v361 = vld [vmem:[#allocation5 + $0x7b0] sm:$0xff]
    %v362 = vld [vmem:[#allocation5 + $0x7b8] sm:$0xff]
    %v363 = vld [vmem:[#allocation5 + $0x7c0] sm:$0xff]
    %v364 = vld [vmem:[#allocation5 + $0x7c8] sm:$0xff]
    %v365 = vld [vmem:[#allocation5 + $0x7d0] sm:$0xff]
    %v366 = vld [vmem:[#allocation5 + $0x7d8] sm:$0xff]
    %v367 = vld [vmem:[#allocation5 + $0x7e0] sm:$0xff]
    %v368 = vld [vmem:[#allocation5 + $0x7e8] sm:$0xff]
    %v369 = vld [vmem:[#allocation5 + $0x7f0] sm:$0xff]
    %v370 = vld [vmem:[#allocation5 + $0x7f8] sm:$0xff]
    %v371 = vld [vmem:[%s2] sm:$0xf]
    %v373 = vlaneseq
    %v374 = vshrl.u32 %v373, 7
    %v375 = vsub.s32 0, %v374
    %v376 = vrot.slane %v371, %v375
    %v377 = vlaneseq
    %v378 = vshrl.u32 %v377, 7
    %v379 = vsub.s32 1, %v378
    %v380 = vrot.slane %v371, %v379
    %v381 = vlaneseq
    %v382 = vshrl.u32 %v381, 7
    %v383 = vsub.s32 2, %v382
    %v384 = vrot.slane %v371, %v383
    %v385 = vlaneseq
    %v386 = vshrl.u32 %v385, 7
    %v387 = vsub.s32 3, %v386
    %v388 = vrot.slane %v371, %v387
    %v649 = vunpack.c.l.b16 %v115
    %v650 = vunpack.c.h.b16 %v115
    %v651 = vunpack.c.l.b16 %v116
    %v652 = vunpack.c.h.b16 %v116
    %v653 = vunpack.c.l.b16 %v117
    %v654 = vunpack.c.h.b16 %v117
    %v655 = vunpack.c.l.b16 %v118
    %v656 = vunpack.c.h.b16 %v118
    %v657 = vunpack.c.l.b16 %v119
    %v658 = vunpack.c.h.b16 %v119
    %v659 = vunpack.c.l.b16 %v120
    %v660 = vunpack.c.h.b16 %v120
    %v661 = vunpack.c.l.b16 %v121
    %v662 = vunpack.c.h.b16 %v121
    %v663 = vunpack.c.l.b16 %v122
    %v664 = vunpack.c.h.b16 %v122
    %v665 = vunpack.c.l.b16 %v123
    %v666 = vunpack.c.h.b16 %v123
    %v667 = vunpack.c.l.b16 %v124
    %v668 = vunpack.c.h.b16 %v124
    %v669 = vunpack.c.l.b16 %v125
    %v670 = vunpack.c.h.b16 %v125
    %v671 = vunpack.c.l.b16 %v126
    %v672 = vunpack.c.h.b16 %v126
    %v673 = vunpack.c.l.b16 %v127
    %v674 = vunpack.c.h.b16 %v127
    %v675 = vunpack.c.l.b16 %v128
    %v676 = vunpack.c.h.b16 %v128
    %v677 = vunpack.c.l.b16 %v129
    %v678 = vunpack.c.h.b16 %v129
    %v679 = vunpack.c.l.b16 %v130
    %v680 = vunpack.c.h.b16 %v130
    %v681 = vunpack.c.l.b16 %v131
    %v682 = vunpack.c.h.b16 %v131
    %v683 = vunpack.c.l.b16 %v132
    %v684 = vunpack.c.h.b16 %v132
    %v685 = vunpack.c.l.b16 %v133
    %v686 = vunpack.c.h.b16 %v133
    %v687 = vunpack.c.l.b16 %v134
    %v688 = vunpack.c.h.b16 %v134
    %v689 = vunpack.c.l.b16 %v135
    %v690 = vunpack.c.h.b16 %v135
    %v691 = vunpack.c.l.b16 %v136
    %v692 = vunpack.c.h.b16 %v136
    %v693 = vunpack.c.l.b16 %v137
    %v694 = vunpack.c.h.b16 %v137
    %v695 = vunpack.c.l.b16 %v138
    %v696 = vunpack.c.h.b16 %v138
    %v697 = vunpack.c.l.b16 %v139
    %v698 = vunpack.c.h.b16 %v139
    %v699 = vunpack.c.l.b16 %v140
    %v700 = vunpack.c.h.b16 %v140
    %v701 = vunpack.c.l.b16 %v141
    %v702 = vunpack.c.h.b16 %v141
    %v703 = vunpack.c.l.b16 %v142
    %v704 = vunpack.c.h.b16 %v142
    %v705 = vunpack.c.l.b16 %v143
    %v706 = vunpack.c.h.b16 %v143
    %v707 = vunpack.c.l.b16 %v144
    %v708 = vunpack.c.h.b16 %v144
    %v709 = vunpack.c.l.b16 %v145
    %v710 = vunpack.c.h.b16 %v145
    %v711 = vunpack.c.l.b16 %v146
    %v712 = vunpack.c.h.b16 %v146
    %v713 = vunpack.c.l.b16 %v147
    %v714 = vunpack.c.h.b16 %v147
    %v715 = vunpack.c.l.b16 %v148
    %v716 = vunpack.c.h.b16 %v148
    %v717 = vunpack.c.l.b16 %v149
    %v718 = vunpack.c.h.b16 %v149
    %v719 = vunpack.c.l.b16 %v150
    %v720 = vunpack.c.h.b16 %v150
    %v721 = vunpack.c.l.b16 %v151
    %v722 = vunpack.c.h.b16 %v151
    %v723 = vunpack.c.l.b16 %v152
    %v724 = vunpack.c.h.b16 %v152
    %v725 = vunpack.c.l.b16 %v153
    %v726 = vunpack.c.h.b16 %v153
    %v727 = vunpack.c.l.b16 %v154
    %v728 = vunpack.c.h.b16 %v154
    %v729 = vunpack.c.l.b16 %v155
    %v730 = vunpack.c.h.b16 %v155
    %v731 = vunpack.c.l.b16 %v156
    %v732 = vunpack.c.h.b16 %v156
    %v733 = vunpack.c.l.b16 %v157
    %v734 = vunpack.c.h.b16 %v157
    %v735 = vunpack.c.l.b16 %v158
    %v736 = vunpack.c.h.b16 %v158
    %v737 = vunpack.c.l.b16 %v159
    %v738 = vunpack.c.h.b16 %v159
    %v739 = vunpack.c.l.b16 %v160
    %v740 = vunpack.c.h.b16 %v160
    %v741 = vunpack.c.l.b16 %v161
    %v742 = vunpack.c.h.b16 %v161
    %v743 = vunpack.c.l.b16 %v162
    %v744 = vunpack.c.h.b16 %v162
    %v745 = vunpack.c.l.b16 %v163
    %v746 = vunpack.c.h.b16 %v163
    %v747 = vunpack.c.l.b16 %v164
    %v748 = vunpack.c.h.b16 %v164
    %v749 = vunpack.c.l.b16 %v165
    %v750 = vunpack.c.h.b16 %v165
    %v751 = vunpack.c.l.b16 %v166
    %v752 = vunpack.c.h.b16 %v166
    %v753 = vunpack.c.l.b16 %v167
    %v754 = vunpack.c.h.b16 %v167
    %v755 = vunpack.c.l.b16 %v168
    %v756 = vunpack.c.h.b16 %v168
    %v757 = vunpack.c.l.b16 %v169
    %v758 = vunpack.c.h.b16 %v169
    %v759 = vunpack.c.l.b16 %v170
    %v760 = vunpack.c.h.b16 %v170
    %v761 = vunpack.c.l.b16 %v171
    %v762 = vunpack.c.h.b16 %v171
    %v763 = vunpack.c.l.b16 %v172
    %v764 = vunpack.c.h.b16 %v172
    %v765 = vunpack.c.l.b16 %v173
    %v766 = vunpack.c.h.b16 %v173
    %v767 = vunpack.c.l.b16 %v174
    %v768 = vunpack.c.h.b16 %v174
    %v769 = vunpack.c.l.b16 %v175
    %v770 = vunpack.c.h.b16 %v175
    %v771 = vunpack.c.l.b16 %v176
    %v772 = vunpack.c.h.b16 %v176
    %v773 = vunpack.c.l.b16 %v177
    %v774 = vunpack.c.h.b16 %v177
    %v775 = vunpack.c.l.b16 %v178
    %v776 = vunpack.c.h.b16 %v178
    %v777 = vunpack.c.l.b16 %v179
    %v778 = vunpack.c.h.b16 %v179
    %v779 = vunpack.c.l.b16 %v180
    %v780 = vunpack.c.h.b16 %v180
    %v781 = vunpack.c.l.b16 %v181
    %v782 = vunpack.c.h.b16 %v181
    %v783 = vunpack.c.l.b16 %v182
    %v784 = vunpack.c.h.b16 %v182
    %v785 = vunpack.c.l.b16 %v183
    %v786 = vunpack.c.h.b16 %v183
    %v787 = vunpack.c.l.b16 %v184
    %v788 = vunpack.c.h.b16 %v184
    %v789 = vunpack.c.l.b16 %v185
    %v790 = vunpack.c.h.b16 %v185
    %v791 = vunpack.c.l.b16 %v186
    %v792 = vunpack.c.h.b16 %v186
    %v793 = vunpack.c.l.b16 %v187
    %v794 = vunpack.c.h.b16 %v187
    %v795 = vunpack.c.l.b16 %v188
    %v796 = vunpack.c.h.b16 %v188
    %v797 = vunpack.c.l.b16 %v189
    %v798 = vunpack.c.h.b16 %v189
    %v799 = vunpack.c.l.b16 %v190
    %v800 = vunpack.c.h.b16 %v190
    %v801 = vunpack.c.l.b16 %v191
    %v802 = vunpack.c.h.b16 %v191
    %v803 = vunpack.c.l.b16 %v192
    %v804 = vunpack.c.h.b16 %v192
    %v805 = vunpack.c.l.b16 %v193
    %v806 = vunpack.c.h.b16 %v193
    %v807 = vunpack.c.l.b16 %v194
    %v808 = vunpack.c.h.b16 %v194
    %v809 = vunpack.c.l.b16 %v195
    %v810 = vunpack.c.h.b16 %v195
    %v811 = vunpack.c.l.b16 %v196
    %v812 = vunpack.c.h.b16 %v196
    %v813 = vunpack.c.l.b16 %v197
    %v814 = vunpack.c.h.b16 %v197
    %v815 = vunpack.c.l.b16 %v198
    %v816 = vunpack.c.h.b16 %v198
    %v817 = vunpack.c.l.b16 %v199
    %v818 = vunpack.c.h.b16 %v199
    %v819 = vunpack.c.l.b16 %v200
    %v820 = vunpack.c.h.b16 %v200
    %v821 = vunpack.c.l.b16 %v201
    %v822 = vunpack.c.h.b16 %v201
    %v823 = vunpack.c.l.b16 %v202
    %v824 = vunpack.c.h.b16 %v202
    %v825 = vunpack.c.l.b16 %v203
    %v826 = vunpack.c.h.b16 %v203
    %v827 = vunpack.c.l.b16 %v204
    %v828 = vunpack.c.h.b16 %v204
    %v829 = vunpack.c.l.b16 %v205
    %v830 = vunpack.c.h.b16 %v205
    %v831 = vunpack.c.l.b16 %v206
    %v832 = vunpack.c.h.b16 %v206
    %v833 = vunpack.c.l.b16 %v207
    %v834 = vunpack.c.h.b16 %v207
    %v835 = vunpack.c.l.b16 %v208
    %v836 = vunpack.c.h.b16 %v208
    %v837 = vunpack.c.l.b16 %v209
    %v838 = vunpack.c.h.b16 %v209
    %v839 = vunpack.c.l.b16 %v210
    %v840 = vunpack.c.h.b16 %v210
    %v841 = vunpack.c.l.b16 %v211
    %v842 = vunpack.c.h.b16 %v211
    %v843 = vunpack.c.l.b16 %v212
    %v844 = vunpack.c.h.b16 %v212
    %v845 = vunpack.c.l.b16 %v213
    %v846 = vunpack.c.h.b16 %v213
    %v847 = vunpack.c.l.b16 %v214
    %v848 = vunpack.c.h.b16 %v214
    %v849 = vunpack.c.l.b16 %v215
    %v850 = vunpack.c.h.b16 %v215
    %v851 = vunpack.c.l.b16 %v216
    %v852 = vunpack.c.h.b16 %v216
    %v853 = vunpack.c.l.b16 %v217
    %v854 = vunpack.c.h.b16 %v217
    %v855 = vunpack.c.l.b16 %v218
    %v856 = vunpack.c.h.b16 %v218
    %v857 = vunpack.c.l.b16 %v219
    %v858 = vunpack.c.h.b16 %v219
    %v859 = vunpack.c.l.b16 %v220
    %v860 = vunpack.c.h.b16 %v220
    %v861 = vunpack.c.l.b16 %v221
    %v862 = vunpack.c.h.b16 %v221
    %v863 = vunpack.c.l.b16 %v222
    %v864 = vunpack.c.h.b16 %v222
    %v865 = vunpack.c.l.b16 %v223
    %v866 = vunpack.c.h.b16 %v223
    %v867 = vunpack.c.l.b16 %v224
    %v868 = vunpack.c.h.b16 %v224
    %v869 = vunpack.c.l.b16 %v225
    %v870 = vunpack.c.h.b16 %v225
    %v871 = vunpack.c.l.b16 %v226
    %v872 = vunpack.c.h.b16 %v226
    %v873 = vunpack.c.l.b16 %v227
    %v874 = vunpack.c.h.b16 %v227
    %v875 = vunpack.c.l.b16 %v228
    %v876 = vunpack.c.h.b16 %v228
    %v877 = vunpack.c.l.b16 %v229
    %v878 = vunpack.c.h.b16 %v229
    %v879 = vunpack.c.l.b16 %v230
    %v880 = vunpack.c.h.b16 %v230
    %v881 = vunpack.c.l.b16 %v231
    %v882 = vunpack.c.h.b16 %v231
    %v883 = vunpack.c.l.b16 %v232
    %v884 = vunpack.c.h.b16 %v232
    %v885 = vunpack.c.l.b16 %v233
    %v886 = vunpack.c.h.b16 %v233
    %v887 = vunpack.c.l.b16 %v234
    %v888 = vunpack.c.h.b16 %v234
    %v889 = vunpack.c.l.b16 %v235
    %v890 = vunpack.c.h.b16 %v235
    %v891 = vunpack.c.l.b16 %v236
    %v892 = vunpack.c.h.b16 %v236
    %v893 = vunpack.c.l.b16 %v237
    %v894 = vunpack.c.h.b16 %v237
    %v895 = vunpack.c.l.b16 %v238
    %v896 = vunpack.c.h.b16 %v238
    %v897 = vunpack.c.l.b16 %v239
    %v898 = vunpack.c.h.b16 %v239
    %v899 = vunpack.c.l.b16 %v240
    %v900 = vunpack.c.h.b16 %v240
    %v901 = vunpack.c.l.b16 %v241
    %v902 = vunpack.c.h.b16 %v241
    %v903 = vunpack.c.l.b16 %v242
    %v904 = vunpack.c.h.b16 %v242
    %v905 = vunpack.c.l.b16 %v243
    %v906 = vunpack.c.h.b16 %v243
    %v907 = vunpack.c.l.b16 %v244
    %v908 = vunpack.c.h.b16 %v244
    %v909 = vunpack.c.l.b16 %v245
    %v910 = vunpack.c.h.b16 %v245
    %v911 = vunpack.c.l.b16 %v246
    %v912 = vunpack.c.h.b16 %v246
    %v913 = vunpack.c.l.b16 %v247
    %v914 = vunpack.c.h.b16 %v247
    %v915 = vunpack.c.l.b16 %v248
    %v916 = vunpack.c.h.b16 %v248
    %v917 = vunpack.c.l.b16 %v249
    %v918 = vunpack.c.h.b16 %v249
    %v919 = vunpack.c.l.b16 %v250
    %v920 = vunpack.c.h.b16 %v250
    %v921 = vunpack.c.l.b16 %v251
    %v922 = vunpack.c.h.b16 %v251
    %v923 = vunpack.c.l.b16 %v252
    %v924 = vunpack.c.h.b16 %v252
    %v925 = vunpack.c.l.b16 %v253
    %v926 = vunpack.c.h.b16 %v253
    %v927 = vunpack.c.l.b16 %v254
    %v928 = vunpack.c.h.b16 %v254
    %v929 = vunpack.c.l.b16 %v255
    %v930 = vunpack.c.h.b16 %v255
    %v931 = vunpack.c.l.b16 %v256
    %v932 = vunpack.c.h.b16 %v256
    %v933 = vunpack.c.l.b16 %v257
    %v934 = vunpack.c.h.b16 %v257
    %v935 = vunpack.c.l.b16 %v258
    %v936 = vunpack.c.h.b16 %v258
    %v937 = vunpack.c.l.b16 %v259
    %v938 = vunpack.c.h.b16 %v259
    %v939 = vunpack.c.l.b16 %v260
    %v940 = vunpack.c.h.b16 %v260
    %v941 = vunpack.c.l.b16 %v261
    %v942 = vunpack.c.h.b16 %v261
    %v943 = vunpack.c.l.b16 %v262
    %v944 = vunpack.c.h.b16 %v262
    %v945 = vunpack.c.l.b16 %v263
    %v946 = vunpack.c.h.b16 %v263
    %v947 = vunpack.c.l.b16 %v264
    %v948 = vunpack.c.h.b16 %v264
    %v949 = vunpack.c.l.b16 %v265
    %v950 = vunpack.c.h.b16 %v265
    %v951 = vunpack.c.l.b16 %v266
    %v952 = vunpack.c.h.b16 %v266
    %v953 = vunpack.c.l.b16 %v267
    %v954 = vunpack.c.h.b16 %v267
    %v955 = vunpack.c.l.b16 %v268
    %v956 = vunpack.c.h.b16 %v268
    %v957 = vunpack.c.l.b16 %v269
    %v958 = vunpack.c.h.b16 %v269
    %v959 = vunpack.c.l.b16 %v270
    %v960 = vunpack.c.h.b16 %v270
    %v961 = vunpack.c.l.b16 %v271
    %v962 = vunpack.c.h.b16 %v271
    %v963 = vunpack.c.l.b16 %v272
    %v964 = vunpack.c.h.b16 %v272
    %v965 = vunpack.c.l.b16 %v273
    %v966 = vunpack.c.h.b16 %v273
    %v967 = vunpack.c.l.b16 %v274
    %v968 = vunpack.c.h.b16 %v274
    %v969 = vunpack.c.l.b16 %v275
    %v970 = vunpack.c.h.b16 %v275
    %v971 = vunpack.c.l.b16 %v276
    %v972 = vunpack.c.h.b16 %v276
    %v973 = vunpack.c.l.b16 %v277
    %v974 = vunpack.c.h.b16 %v277
    %v975 = vunpack.c.l.b16 %v278
    %v976 = vunpack.c.h.b16 %v278
    %v977 = vunpack.c.l.b16 %v279
    %v978 = vunpack.c.h.b16 %v279
    %v979 = vunpack.c.l.b16 %v280
    %v980 = vunpack.c.h.b16 %v280
    %v981 = vunpack.c.l.b16 %v281
    %v982 = vunpack.c.h.b16 %v281
    %v983 = vunpack.c.l.b16 %v282
    %v984 = vunpack.c.h.b16 %v282
    %v985 = vunpack.c.l.b16 %v283
    %v986 = vunpack.c.h.b16 %v283
    %v987 = vunpack.c.l.b16 %v284
    %v988 = vunpack.c.h.b16 %v284
    %v989 = vunpack.c.l.b16 %v285
    %v990 = vunpack.c.h.b16 %v285
    %v991 = vunpack.c.l.b16 %v286
    %v992 = vunpack.c.h.b16 %v286
    %v993 = vunpack.c.l.b16 %v287
    %v994 = vunpack.c.h.b16 %v287
    %v995 = vunpack.c.l.b16 %v288
    %v996 = vunpack.c.h.b16 %v288
    %v997 = vunpack.c.l.b16 %v289
    %v998 = vunpack.c.h.b16 %v289
    %v999 = vunpack.c.l.b16 %v290
    %v1000 = vunpack.c.h.b16 %v290
    %v1001 = vunpack.c.l.b16 %v291
    %v1002 = vunpack.c.h.b16 %v291
    %v1003 = vunpack.c.l.b16 %v292
    %v1004 = vunpack.c.h.b16 %v292
    %v1005 = vunpack.c.l.b16 %v293
    %v1006 = vunpack.c.h.b16 %v293
    %v1007 = vunpack.c.l.b16 %v294
    %v1008 = vunpack.c.h.b16 %v294
    %v1009 = vunpack.c.l.b16 %v295
    %v1010 = vunpack.c.h.b16 %v295
    %v1011 = vunpack.c.l.b16 %v296
    %v1012 = vunpack.c.h.b16 %v296
    %v1013 = vunpack.c.l.b16 %v297
    %v1014 = vunpack.c.h.b16 %v297
    %v1015 = vunpack.c.l.b16 %v298
    %v1016 = vunpack.c.h.b16 %v298
    %v1017 = vunpack.c.l.b16 %v299
    %v1018 = vunpack.c.h.b16 %v299
    %v1019 = vunpack.c.l.b16 %v300
    %v1020 = vunpack.c.h.b16 %v300
    %v1021 = vunpack.c.l.b16 %v301
    %v1022 = vunpack.c.h.b16 %v301
    %v1023 = vunpack.c.l.b16 %v302
    %v1024 = vunpack.c.h.b16 %v302
    %v1025 = vunpack.c.l.b16 %v303
    %v1026 = vunpack.c.h.b16 %v303
    %v1027 = vunpack.c.l.b16 %v304
    %v1028 = vunpack.c.h.b16 %v304
    %v1029 = vunpack.c.l.b16 %v305
    %v1030 = vunpack.c.h.b16 %v305
    %v1031 = vunpack.c.l.b16 %v306
    %v1032 = vunpack.c.h.b16 %v306
    %v1033 = vunpack.c.l.b16 %v307
    %v1034 = vunpack.c.h.b16 %v307
    %v1035 = vunpack.c.l.b16 %v308
    %v1036 = vunpack.c.h.b16 %v308
    %v1037 = vunpack.c.l.b16 %v309
    %v1038 = vunpack.c.h.b16 %v309
    %v1039 = vunpack.c.l.b16 %v310
    %v1040 = vunpack.c.h.b16 %v310
    %v1041 = vunpack.c.l.b16 %v311
    %v1042 = vunpack.c.h.b16 %v311
    %v1043 = vunpack.c.l.b16 %v312
    %v1044 = vunpack.c.h.b16 %v312
    %v1045 = vunpack.c.l.b16 %v313
    %v1046 = vunpack.c.h.b16 %v313
    %v1047 = vunpack.c.l.b16 %v314
    %v1048 = vunpack.c.h.b16 %v314
    %v1049 = vunpack.c.l.b16 %v315
    %v1050 = vunpack.c.h.b16 %v315
    %v1051 = vunpack.c.l.b16 %v316
    %v1052 = vunpack.c.h.b16 %v316
    %v1053 = vunpack.c.l.b16 %v317
    %v1054 = vunpack.c.h.b16 %v317
    %v1055 = vunpack.c.l.b16 %v318
    %v1056 = vunpack.c.h.b16 %v318
    %v1057 = vunpack.c.l.b16 %v319
    %v1058 = vunpack.c.h.b16 %v319
    %v1059 = vunpack.c.l.b16 %v320
    %v1060 = vunpack.c.h.b16 %v320
    %v1061 = vunpack.c.l.b16 %v321
    %v1062 = vunpack.c.h.b16 %v321
    %v1063 = vunpack.c.l.b16 %v322
    %v1064 = vunpack.c.h.b16 %v322
    %v1065 = vunpack.c.l.b16 %v323
    %v1066 = vunpack.c.h.b16 %v323
    %v1067 = vunpack.c.l.b16 %v324
    %v1068 = vunpack.c.h.b16 %v324
    %v1069 = vunpack.c.l.b16 %v325
    %v1070 = vunpack.c.h.b16 %v325
    %v1071 = vunpack.c.l.b16 %v326
    %v1072 = vunpack.c.h.b16 %v326
    %v1073 = vunpack.c.l.b16 %v327
    %v1074 = vunpack.c.h.b16 %v327
    %v1075 = vunpack.c.l.b16 %v328
    %v1076 = vunpack.c.h.b16 %v328
    %v1077 = vunpack.c.l.b16 %v329
    %v1078 = vunpack.c.h.b16 %v329
    %v1079 = vunpack.c.l.b16 %v330
    %v1080 = vunpack.c.h.b16 %v330
    %v1081 = vunpack.c.l.b16 %v331
    %v1082 = vunpack.c.h.b16 %v331
    %v1083 = vunpack.c.l.b16 %v332
    %v1084 = vunpack.c.h.b16 %v332
    %v1085 = vunpack.c.l.b16 %v333
    %v1086 = vunpack.c.h.b16 %v333
    %v1087 = vunpack.c.l.b16 %v334
    %v1088 = vunpack.c.h.b16 %v334
    %v1089 = vunpack.c.l.b16 %v335
    %v1090 = vunpack.c.h.b16 %v335
    %v1091 = vunpack.c.l.b16 %v336
    %v1092 = vunpack.c.h.b16 %v336
    %v1093 = vunpack.c.l.b16 %v337
    %v1094 = vunpack.c.h.b16 %v337
    %v1095 = vunpack.c.l.b16 %v338
    %v1096 = vunpack.c.h.b16 %v338
    %v1097 = vunpack.c.l.b16 %v339
    %v1098 = vunpack.c.h.b16 %v339
    %v1099 = vunpack.c.l.b16 %v340
    %v1100 = vunpack.c.h.b16 %v340
    %v1101 = vunpack.c.l.b16 %v341
    %v1102 = vunpack.c.h.b16 %v341
    %v1103 = vunpack.c.l.b16 %v342
    %v1104 = vunpack.c.h.b16 %v342
    %v1105 = vunpack.c.l.b16 %v343
    %v1106 = vunpack.c.h.b16 %v343
    %v1107 = vunpack.c.l.b16 %v344
    %v1108 = vunpack.c.h.b16 %v344
    %v1109 = vunpack.c.l.b16 %v345
    %v1110 = vunpack.c.h.b16 %v345
    %v1111 = vunpack.c.l.b16 %v346
    %v1112 = vunpack.c.h.b16 %v346
    %v1113 = vunpack.c.l.b16 %v347
    %v1114 = vunpack.c.h.b16 %v347
    %v1115 = vunpack.c.l.b16 %v348
    %v1116 = vunpack.c.h.b16 %v348
    %v1117 = vunpack.c.l.b16 %v349
    %v1118 = vunpack.c.h.b16 %v349
    %v1119 = vunpack.c.l.b16 %v350
    %v1120 = vunpack.c.h.b16 %v350
    %v1121 = vunpack.c.l.b16 %v351
    %v1122 = vunpack.c.h.b16 %v351
    %v1123 = vunpack.c.l.b16 %v352
    %v1124 = vunpack.c.h.b16 %v352
    %v1125 = vunpack.c.l.b16 %v353
    %v1126 = vunpack.c.h.b16 %v353
    %v1127 = vunpack.c.l.b16 %v354
    %v1128 = vunpack.c.h.b16 %v354
    %v1129 = vunpack.c.l.b16 %v355
    %v1130 = vunpack.c.h.b16 %v355
    %v1131 = vunpack.c.l.b16 %v356
    %v1132 = vunpack.c.h.b16 %v356
    %v1133 = vunpack.c.l.b16 %v357
    %v1134 = vunpack.c.h.b16 %v357
    %v1135 = vunpack.c.l.b16 %v358
    %v1136 = vunpack.c.h.b16 %v358
    %v1137 = vunpack.c.l.b16 %v359
    %v1138 = vunpack.c.h.b16 %v359
    %v1139 = vunpack.c.l.b16 %v360
    %v1140 = vunpack.c.h.b16 %v360
    %v1141 = vunpack.c.l.b16 %v361
    %v1142 = vunpack.c.h.b16 %v361
    %v1143 = vunpack.c.l.b16 %v362
    %v1144 = vunpack.c.h.b16 %v362
    %v1145 = vunpack.c.l.b16 %v363
    %v1146 = vunpack.c.h.b16 %v363
    %v1147 = vunpack.c.l.b16 %v364
    %v1148 = vunpack.c.h.b16 %v364
    %v1149 = vunpack.c.l.b16 %v365
    %v1150 = vunpack.c.h.b16 %v365
    %v1151 = vunpack.c.l.b16 %v366
    %v1152 = vunpack.c.h.b16 %v366
    %v1153 = vunpack.c.l.b16 %v367
    %v1154 = vunpack.c.h.b16 %v367
    %v1155 = vunpack.c.l.b16 %v368
    %v1156 = vunpack.c.h.b16 %v368
    %v1157 = vunpack.c.l.b16 %v369
    %v1158 = vunpack.c.h.b16 %v369
    %v1159 = vunpack.c.l.b16 %v370
    %v1160 = vunpack.c.h.b16 %v370
    %v1161 = vpack.c.b16 %v653, %v649
    %v1162 = vpack.c.b16 %v654, %v650
    %v1163 = vpack.c.b16 %v655, %v651
    %v1164 = vpack.c.b16 %v656, %v652
    %v1165 = vpack.c.b16 %v661, %v657
    %v1166 = vpack.c.b16 %v662, %v658
    %v1167 = vpack.c.b16 %v663, %v659
    %v1168 = vpack.c.b16 %v664, %v660
    %v1169 = vpack.c.b16 %v669, %v665
    %v1170 = vpack.c.b16 %v670, %v666
    %v1171 = vpack.c.b16 %v671, %v667
    %v1172 = vpack.c.b16 %v672, %v668
    %v1173 = vpack.c.b16 %v677, %v673
    %v1174 = vpack.c.b16 %v678, %v674
    %v1175 = vpack.c.b16 %v679, %v675
    %v1176 = vpack.c.b16 %v680, %v676
    %v1177 = vpack.c.b16 %v685, %v681
    %v1178 = vpack.c.b16 %v686, %v682
    %v1179 = vpack.c.b16 %v687, %v683
    %v1180 = vpack.c.b16 %v688, %v684
    %v1181 = vpack.c.b16 %v693, %v689
    %v1182 = vpack.c.b16 %v694, %v690
    %v1183 = vpack.c.b16 %v695, %v691
    %v1184 = vpack.c.b16 %v696, %v692
    %v1185 = vpack.c.b16 %v701, %v697
    %v1186 = vpack.c.b16 %v702, %v698
    %v1187 = vpack.c.b16 %v703, %v699
    %v1188 = vpack.c.b16 %v704, %v700
    %v1189 = vpack.c.b16 %v709, %v705
    %v1190 = vpack.c.b16 %v710, %v706
    %v1191 = vpack.c.b16 %v711, %v707
    %v1192 = vpack.c.b16 %v712, %v708
    %v1193 = vpack.c.b16 %v717, %v713
    %v1194 = vpack.c.b16 %v718, %v714
    %v1195 = vpack.c.b16 %v719, %v715
    %v1196 = vpack.c.b16 %v720, %v716
    %v1197 = vpack.c.b16 %v725, %v721
    %v1198 = vpack.c.b16 %v726, %v722
    %v1199 = vpack.c.b16 %v727, %v723
    %v1200 = vpack.c.b16 %v728, %v724
    %v1201 = vpack.c.b16 %v733, %v729
    %v1202 = vpack.c.b16 %v734, %v730
    %v1203 = vpack.c.b16 %v735, %v731
    %v1204 = vpack.c.b16 %v736, %v732
    %v1205 = vpack.c.b16 %v741, %v737
    %v1206 = vpack.c.b16 %v742, %v738
    %v1207 = vpack.c.b16 %v743, %v739
    %v1208 = vpack.c.b16 %v744, %v740
    %v1209 = vpack.c.b16 %v749, %v745
    %v1210 = vpack.c.b16 %v750, %v746
    %v1211 = vpack.c.b16 %v751, %v747
    %v1212 = vpack.c.b16 %v752, %v748
    %v1213 = vpack.c.b16 %v757, %v753
    %v1214 = vpack.c.b16 %v758, %v754
    %v1215 = vpack.c.b16 %v759, %v755
    %v1216 = vpack.c.b16 %v760, %v756
    %v1217 = vpack.c.b16 %v765, %v761
    %v1218 = vpack.c.b16 %v766, %v762
    %v1219 = vpack.c.b16 %v767, %v763
    %v1220 = vpack.c.b16 %v768, %v764
    %v1221 = vpack.c.b16 %v773, %v769
    %v1222 = vpack.c.b16 %v774, %v770
    %v1223 = vpack.c.b16 %v775, %v771
    %v1224 = vpack.c.b16 %v776, %v772
    %v1225 = vpack.c.b16 %v781, %v777
    %v1226 = vpack.c.b16 %v782, %v778
    %v1227 = vpack.c.b16 %v783, %v779
    %v1228 = vpack.c.b16 %v784, %v780
    %v1229 = vpack.c.b16 %v789, %v785
    %v1230 = vpack.c.b16 %v790, %v786
    %v1231 = vpack.c.b16 %v791, %v787
    %v1232 = vpack.c.b16 %v792, %v788
    %v1233 = vpack.c.b16 %v797, %v793
    %v1234 = vpack.c.b16 %v798, %v794
    %v1235 = vpack.c.b16 %v799, %v795
    %v1236 = vpack.c.b16 %v800, %v796
    %v1237 = vpack.c.b16 %v805, %v801
    %v1238 = vpack.c.b16 %v806, %v802
    %v1239 = vpack.c.b16 %v807, %v803
    %v1240 = vpack.c.b16 %v808, %v804
    %v1241 = vpack.c.b16 %v813, %v809
    %v1242 = vpack.c.b16 %v814, %v810
    %v1243 = vpack.c.b16 %v815, %v811
    %v1244 = vpack.c.b16 %v816, %v812
    %v1245 = vpack.c.b16 %v821, %v817
    %v1246 = vpack.c.b16 %v822, %v818
    %v1247 = vpack.c.b16 %v823, %v819
    %v1248 = vpack.c.b16 %v824, %v820
    %v1249 = vpack.c.b16 %v829, %v825
    %v1250 = vpack.c.b16 %v830, %v826
    %v1251 = vpack.c.b16 %v831, %v827
    %v1252 = vpack.c.b16 %v832, %v828
    %v1253 = vpack.c.b16 %v837, %v833
    %v1254 = vpack.c.b16 %v838, %v834
    %v1255 = vpack.c.b16 %v839, %v835
    %v1256 = vpack.c.b16 %v840, %v836
    %v1257 = vpack.c.b16 %v845, %v841
    %v1258 = vpack.c.b16 %v846, %v842
    %v1259 = vpack.c.b16 %v847, %v843
    %v1260 = vpack.c.b16 %v848, %v844
    %v1261 = vpack.c.b16 %v853, %v849
    %v1262 = vpack.c.b16 %v854, %v850
    %v1263 = vpack.c.b16 %v855, %v851
    %v1264 = vpack.c.b16 %v856, %v852
    %v1265 = vpack.c.b16 %v861, %v857
    %v1266 = vpack.c.b16 %v862, %v858
    %v1267 = vpack.c.b16 %v863, %v859
    %v1268 = vpack.c.b16 %v864, %v860
    %v1269 = vpack.c.b16 %v869, %v865
    %v1270 = vpack.c.b16 %v870, %v866
    %v1271 = vpack.c.b16 %v871, %v867
    %v1272 = vpack.c.b16 %v872, %v868
    %v1273 = vpack.c.b16 %v877, %v873
    %v1274 = vpack.c.b16 %v878, %v874
    %v1275 = vpack.c.b16 %v879, %v875
    %v1276 = vpack.c.b16 %v880, %v876
    %v1277 = vpack.c.b16 %v885, %v881
    %v1278 = vpack.c.b16 %v886, %v882
    %v1279 = vpack.c.b16 %v887, %v883
    %v1280 = vpack.c.b16 %v888, %v884
    %v1281 = vpack.c.b16 %v893, %v889
    %v1282 = vpack.c.b16 %v894, %v890
    %v1283 = vpack.c.b16 %v895, %v891
    %v1284 = vpack.c.b16 %v896, %v892
    %v1285 = vpack.c.b16 %v901, %v897
    %v1286 = vpack.c.b16 %v902, %v898
    %v1287 = vpack.c.b16 %v903, %v899
    %v1288 = vpack.c.b16 %v904, %v900
    %v1289 = vpack.c.b16 %v909, %v905
    %v1290 = vpack.c.b16 %v910, %v906
    %v1291 = vpack.c.b16 %v911, %v907
    %v1292 = vpack.c.b16 %v912, %v908
    %v1293 = vpack.c.b16 %v917, %v913
    %v1294 = vpack.c.b16 %v918, %v914
    %v1295 = vpack.c.b16 %v919, %v915
    %v1296 = vpack.c.b16 %v920, %v916
    %v1297 = vpack.c.b16 %v925, %v921
    %v1298 = vpack.c.b16 %v926, %v922
    %v1299 = vpack.c.b16 %v927, %v923
    %v1300 = vpack.c.b16 %v928, %v924
    %v1301 = vpack.c.b16 %v933, %v929
    %v1302 = vpack.c.b16 %v934, %v930
    %v1303 = vpack.c.b16 %v935, %v931
    %v1304 = vpack.c.b16 %v936, %v932
    %v1305 = vpack.c.b16 %v941, %v937
    %v1306 = vpack.c.b16 %v942, %v938
    %v1307 = vpack.c.b16 %v943, %v939
    %v1308 = vpack.c.b16 %v944, %v940
    %v1309 = vpack.c.b16 %v949, %v945
    %v1310 = vpack.c.b16 %v950, %v946
    %v1311 = vpack.c.b16 %v951, %v947
    %v1312 = vpack.c.b16 %v952, %v948
    %v1313 = vpack.c.b16 %v957, %v953
    %v1314 = vpack.c.b16 %v958, %v954
    %v1315 = vpack.c.b16 %v959, %v955
    %v1316 = vpack.c.b16 %v960, %v956
    %v1317 = vpack.c.b16 %v965, %v961
    %v1318 = vpack.c.b16 %v966, %v962
    %v1319 = vpack.c.b16 %v967, %v963
    %v1320 = vpack.c.b16 %v968, %v964
    %v1321 = vpack.c.b16 %v973, %v969
    %v1322 = vpack.c.b16 %v974, %v970
    %v1323 = vpack.c.b16 %v975, %v971
    %v1324 = vpack.c.b16 %v976, %v972
    %v1325 = vpack.c.b16 %v981, %v977
    %v1326 = vpack.c.b16 %v982, %v978
    %v1327 = vpack.c.b16 %v983, %v979
    %v1328 = vpack.c.b16 %v984, %v980
    %v1329 = vpack.c.b16 %v989, %v985
    %v1330 = vpack.c.b16 %v990, %v986
    %v1331 = vpack.c.b16 %v991, %v987
    %v1332 = vpack.c.b16 %v992, %v988
    %v1333 = vpack.c.b16 %v997, %v993
    %v1334 = vpack.c.b16 %v998, %v994
    %v1335 = vpack.c.b16 %v999, %v995
    %v1336 = vpack.c.b16 %v1000, %v996
    %v1337 = vpack.c.b16 %v1005, %v1001
    %v1338 = vpack.c.b16 %v1006, %v1002
    %v1339 = vpack.c.b16 %v1007, %v1003
    %v1340 = vpack.c.b16 %v1008, %v1004
    %v1341 = vpack.c.b16 %v1013, %v1009
    %v1342 = vpack.c.b16 %v1014, %v1010
    %v1343 = vpack.c.b16 %v1015, %v1011
    %v1344 = vpack.c.b16 %v1016, %v1012
    %v1345 = vpack.c.b16 %v1021, %v1017
    %v1346 = vpack.c.b16 %v1022, %v1018
    %v1347 = vpack.c.b16 %v1023, %v1019
    %v1348 = vpack.c.b16 %v1024, %v1020
    %v1349 = vpack.c.b16 %v1029, %v1025
    %v1350 = vpack.c.b16 %v1030, %v1026
    %v1351 = vpack.c.b16 %v1031, %v1027
    %v1352 = vpack.c.b16 %v1032, %v1028
    %v1353 = vpack.c.b16 %v1037, %v1033
    %v1354 = vpack.c.b16 %v1038, %v1034
    %v1355 = vpack.c.b16 %v1039, %v1035
    %v1356 = vpack.c.b16 %v1040, %v1036
    %v1357 = vpack.c.b16 %v1045, %v1041
    %v1358 = vpack.c.b16 %v1046, %v1042
    %v1359 = vpack.c.b16 %v1047, %v1043
    %v1360 = vpack.c.b16 %v1048, %v1044
    %v1361 = vpack.c.b16 %v1053, %v1049
    %v1362 = vpack.c.b16 %v1054, %v1050
    %v1363 = vpack.c.b16 %v1055, %v1051
    %v1364 = vpack.c.b16 %v1056, %v1052
    %v1365 = vpack.c.b16 %v1061, %v1057
    %v1366 = vpack.c.b16 %v1062, %v1058
    %v1367 = vpack.c.b16 %v1063, %v1059
    %v1368 = vpack.c.b16 %v1064, %v1060
    %v1369 = vpack.c.b16 %v1069, %v1065
    %v1370 = vpack.c.b16 %v1070, %v1066
    %v1371 = vpack.c.b16 %v1071, %v1067
    %v1372 = vpack.c.b16 %v1072, %v1068
    %v1373 = vpack.c.b16 %v1077, %v1073
    %v1374 = vpack.c.b16 %v1078, %v1074
    %v1375 = vpack.c.b16 %v1079, %v1075
    %v1376 = vpack.c.b16 %v1080, %v1076
    %v1377 = vpack.c.b16 %v1085, %v1081
    %v1378 = vpack.c.b16 %v1086, %v1082
    %v1379 = vpack.c.b16 %v1087, %v1083
    %v1380 = vpack.c.b16 %v1088, %v1084
    %v1381 = vpack.c.b16 %v1093, %v1089
    %v1382 = vpack.c.b16 %v1094, %v1090
    %v1383 = vpack.c.b16 %v1095, %v1091
    %v1384 = vpack.c.b16 %v1096, %v1092
    %v1385 = vpack.c.b16 %v1101, %v1097
    %v1386 = vpack.c.b16 %v1102, %v1098
    %v1387 = vpack.c.b16 %v1103, %v1099
    %v1388 = vpack.c.b16 %v1104, %v1100
    %v1389 = vpack.c.b16 %v1109, %v1105
    %v1390 = vpack.c.b16 %v1110, %v1106
    %v1391 = vpack.c.b16 %v1111, %v1107
    %v1392 = vpack.c.b16 %v1112, %v1108
    %v1393 = vpack.c.b16 %v1117, %v1113
    %v1394 = vpack.c.b16 %v1118, %v1114
    %v1395 = vpack.c.b16 %v1119, %v1115
    %v1396 = vpack.c.b16 %v1120, %v1116
    %v1397 = vpack.c.b16 %v1125, %v1121
    %v1398 = vpack.c.b16 %v1126, %v1122
    %v1399 = vpack.c.b16 %v1127, %v1123
    %v1400 = vpack.c.b16 %v1128, %v1124
    %v1401 = vpack.c.b16 %v1133, %v1129
    %v1402 = vpack.c.b16 %v1134, %v1130
    %v1403 = vpack.c.b16 %v1135, %v1131
    %v1404 = vpack.c.b16 %v1136, %v1132
    %v1405 = vpack.c.b16 %v1141, %v1137
    %v1406 = vpack.c.b16 %v1142, %v1138
    %v1407 = vpack.c.b16 %v1143, %v1139
    %v1408 = vpack.c.b16 %v1144, %v1140
    %v1409 = vpack.c.b16 %v1149, %v1145
    %v1410 = vpack.c.b16 %v1150, %v1146
    %v1411 = vpack.c.b16 %v1151, %v1147
    %v1412 = vpack.c.b16 %v1152, %v1148
    %v1413 = vpack.c.b16 %v1157, %v1153
    %v1414 = vpack.c.b16 %v1158, %v1154
    %v1415 = vpack.c.b16 %v1159, %v1155
    %v1416 = vpack.c.b16 %v1160, %v1156
    %1673 = vmatprep.subr.bf16.mxu0 %v1162
    %1674 = vmatpush1.bf16.msra.mxu0 %v1161
    %1675 = vmatprep.subr.bf16.mxu0 %v1166
    %1676 = vmatpush1.bf16.msra.mxu0 %v1165
    %1677 = vmatprep.subr.bf16.mxu0 %v1170
    %1678 = vmatpush1.bf16.msra.mxu0 %v1169
    %1679 = vmatprep.subr.bf16.mxu0 %v1174
    %1680 = vmatpush1.bf16.msra.mxu0 %v1173
    %1681 = vmatprep.subr.bf16.mxu0 %v1178
    %1682 = vmatpush1.bf16.msra.mxu0 %v1177
    %1683 = vmatprep.subr.bf16.mxu0 %v1182
    %1684 = vmatpush1.bf16.msra.mxu0 %v1181
    %1685 = vmatprep.subr.bf16.mxu0 %v1186
    %1686 = vmatpush1.bf16.msra.mxu0 %v1185
    %1687 = vmatprep.subr.bf16.mxu0 %v1190
    %1688 = vmatpush1.bf16.msra.mxu0 %v1189
    %1689 = vmatprep.subr.bf16.mxu0 %v1194
    %1690 = vmatpush1.bf16.msra.mxu0 %v1193
    %1691 = vmatprep.subr.bf16.mxu0 %v1198
    %1692 = vmatpush1.bf16.msra.mxu0 %v1197
    %1693 = vmatprep.subr.bf16.mxu0 %v1202
    %1694 = vmatpush1.bf16.msra.mxu0 %v1201
    %1695 = vmatprep.subr.bf16.mxu0 %v1206
    %1696 = vmatpush1.bf16.msra.mxu0 %v1205
    %1697 = vmatprep.subr.bf16.mxu0 %v1210
    %1698 = vmatpush1.bf16.msra.mxu0 %v1209
    %1699 = vmatprep.subr.bf16.mxu0 %v1214
    %1700 = vmatpush1.bf16.msra.mxu0 %v1213
    %1701 = vmatprep.subr.bf16.mxu0 %v1218
    %1702 = vmatpush1.bf16.msra.mxu0 %v1217
    %1703 = vmatprep.subr.bf16.mxu0 %v1222
    %1704 = vmatpush1.bf16.msra.mxu0 %v1221
    %1705 = vmatprep.mubr.bf16.mxu0 %v92
    %1706 = vmatmul.mubr.bf16.gmra.mrb[0].mxu0 %v91
    %v1707 = vpop.f32.mrb[0].mxu0
    %v1708 = vadd.f32 %v376, %v1707
    %v1709 = vpop.f32.mrb[0].mxu0
    %v1710 = vadd.f32 %v380, %v1709
    %v1711 = vpop.f32.mrb[0].mxu0
    %v1712 = vadd.f32 %v376, %v1711
    %v1713 = vpop.f32.mrb[0].mxu0
    %v1714 = vadd.f32 %v380, %v1713
    %1715 = vmatprep.mubr.bf16.mxu0 %v100
    %1716 = vmatmul.mubr.bf16.gmra.mrb[0].mxu0 %v99
    %v1717 = vpop.f32.mrb[0].mxu0
    %v1718 = vadd.f32 %v376, %v1717
    %v1719 = vpop.f32.mrb[0].mxu0
    %v1720 = vadd.f32 %v380, %v1719
    %v1721 = vpop.f32.mrb[0].mxu0
    %v1722 = vadd.f32 %v376, %v1721
    %v1723 = vpop.f32.mrb[0].mxu0
    %v1724 = vadd.f32 %v380, %v1723
    %1725 = vmatprep.mubr.bf16.mxu0 %v108
    %1726 = vmatmul.mubr.bf16.gmra.mrb[0].mxu0 %v107
    %v1727 = vpop.f32.mrb[0].mxu0
    %v1728 = vadd.f32 %v376, %v1727
    %v1729 = vpop.f32.mrb[0].mxu0
    %v1730 = vadd.f32 %v380, %v1729
    %v1731 = vpop.f32.mrb[0].mxu0
    %v1732 = vadd.f32 %v376, %v1731
    %v1733 = vpop.f32.mrb[0].mxu0
    %v1734 = vadd.f32 %v380, %v1733
    %1735 = vdwg.mxu0
    %1736 = vmatprep.subr.bf16.mxu0 %v1226
    %1737 = vmatpush1.bf16.msra.mxu0 %v1225
    %1738 = vmatprep.subr.bf16.mxu0 %v1230
    %1739 = vmatpush1.bf16.msra.mxu0 %v1229
    %1740 = vmatprep.subr.bf16.mxu0 %v1234
    %1741 = vmatpush1.bf16.msra.mxu0 %v1233
    %1742 = vmatprep.subr.bf16.mxu0 %v1238
    %1743 = vmatpush1.bf16.msra.mxu0 %v1237
    %1744 = vmatprep.subr.bf16.mxu0 %v1242
    %1745 = vmatpush1.bf16.msra.mxu0 %v1241
    %1746 = vmatprep.subr.bf16.mxu0 %v1246
    %1747 = vmatpush1.bf16.msra.mxu0 %v1245
    %1748 = vmatprep.subr.bf16.mxu0 %v1250
    %1749 = vmatpush1.bf16.msra.mxu0 %v1249
    %1750 = vmatprep.subr.bf16.mxu0 %v1254
    %1751 = vmatpush1.bf16.msra.mxu0 %v1253
    %1752 = vmatprep.subr.bf16.mxu0 %v1258
    %1753 = vmatpush1.bf16.msra.mxu0 %v1257
    %1754 = vmatprep.subr.bf16.mxu0 %v1262
    %1755 = vmatpush1.bf16.msra.mxu0 %v1261
    %1756 = vmatprep.subr.bf16.mxu0 %v1266
    %1757 = vmatpush1.bf16.msra.mxu0 %v1265
    %1758 = vmatprep.subr.bf16.mxu0 %v1270
    %1759 = vmatpush1.bf16.msra.mxu0 %v1269
    %1760 = vmatprep.subr.bf16.mxu0 %v1274
    %1761 = vmatpush1.bf16.msra.mxu0 %v1273
    %1762 = vmatprep.subr.bf16.mxu0 %v1278
    %1763 = vmatpush1.bf16.msra.mxu0 %v1277
    %1764 = vmatprep.subr.bf16.mxu0 %v1282
    %1765 = vmatpush1.bf16.msra.mxu0 %v1281
    %1766 = vmatprep.subr.bf16.mxu0 %v1286
    %1767 = vmatpush1.bf16.msra.mxu0 %v1285
    %1768 = vmatprep.mubr.bf16.mxu0 %v94
    %1769 = vmatmul.mubr.bf16.gmra.mrb[0].mxu0 %v93
    %v1770 = vpop.f32.mrb[0].mxu0
    %v1771 = vadd.f32 %v1708, %v1770
    %v1772 = vpop.f32.mrb[0].mxu0
    %v1773 = vadd.f32 %v1710, %v1772
    %v1774 = vpop.f32.mrb[0].mxu0
    %v1775 = vadd.f32 %v1712, %v1774
    %v1776 = vpop.f32.mrb[0].mxu0
    %v1777 = vadd.f32 %v1714, %v1776
    %1778 = vmatprep.mubr.bf16.mxu0 %v102
    %1779 = vmatmul.mubr.bf16.gmra.mrb[0].mxu0 %v101
    %v1780 = vpop.f32.mrb[0].mxu0
    %v1781 = vadd.f32 %v1718, %v1780
    %v1782 = vpop.f32.mrb[0].mxu0
    %v1783 = vadd.f32 %v1720, %v1782
    %v1784 = vpop.f32.mrb[0].mxu0
    %v1785 = vadd.f32 %v1722, %v1784
    %v1786 = vpop.f32.mrb[0].mxu0
    %v1787 = vadd.f32 %v1724, %v1786
    %1788 = vmatprep.mubr.bf16.mxu0 %v110
    %1789 = vmatmul.mubr.bf16.gmra.mrb[0].mxu0 %v109
    %v1790 = vpop.f32.mrb[0].mxu0
    %v1791 = vadd.f32 %v1728, %v1790
    %v1792 = vpop.f32.mrb[0].mxu0
    %v1793 = vadd.f32 %v1730, %v1792
    %v1794 = vpop.f32.mrb[0].mxu0
    %v1795 = vadd.f32 %v1732, %v1794
    %v1796 = vpop.f32.mrb[0].mxu0
    %v1797 = vadd.f32 %v1734, %v1796
    %1798 = vdwg.mxu0
    %1799 = vmatprep.subr.bf16.mxu0 %v1290
    %1800 = vmatpush1.bf16.msra.mxu0 %v1289
    %1801 = vmatprep.subr.bf16.mxu0 %v1294
    %1802 = vmatpush1.bf16.msra.mxu0 %v1293
    %1803 = vmatprep.subr.bf16.mxu0 %v1298
    %1804 = vmatpush1.bf16.msra.mxu0 %v1297
    %1805 = vmatprep.subr.bf16.mxu0 %v1302
    %1806 = vmatpush1.bf16.msra.mxu0 %v1301
    %1807 = vmatprep.subr.bf16.mxu0 %v1306
    %1808 = vmatpush1.bf16.msra.mxu0 %v1305
    %1809 = vmatprep.subr.bf16.mxu0 %v1310
    %1810 = vmatpush1.bf16.msra.mxu0 %v1309
    %1811 = vmatprep.subr.bf16.mxu0 %v1314
    %1812 = vmatpush1.bf16.msra.mxu0 %v1313
    %1813 = vmatprep.subr.bf16.mxu0 %v1318
    %1814 = vmatpush1.bf16.msra.mxu0 %v1317
    %1815 = vmatprep.subr.bf16.mxu0 %v1322
    %1816 = vmatpush1.bf16.msra.mxu0 %v1321
    %1817 = vmatprep.subr.bf16.mxu0 %v1326
    %1818 = vmatpush1.bf16.msra.mxu0 %v1325
    %1819 = vmatprep.subr.bf16.mxu0 %v1330
    %1820 = vmatpush1.bf16.msra.mxu0 %v1329
    %1821 = vmatprep.subr.bf16.mxu0 %v1334
    %1822 = vmatpush1.bf16.msra.mxu0 %v1333
    %1823 = vmatprep.subr.bf16.mxu0 %v1338
    %1824 = vmatpush1.bf16.msra.mxu0 %v1337
    %1825 = vmatprep.subr.bf16.mxu0 %v1342
    %1826 = vmatpush1.bf16.msra.mxu0 %v1341
    %1827 = vmatprep.subr.bf16.mxu0 %v1346
    %1828 = vmatpush1.bf16.msra.mxu0 %v1345
    %1829 = vmatprep.subr.bf16.mxu0 %v1350
    %1830 = vmatpush1.bf16.msra.mxu0 %v1349
    %1831 = vmatprep.mubr.bf16.mxu0 %v96
    %1832 = vmatmul.mubr.bf16.gmra.mrb[0].mxu0 %v95
    %v1833 = vpop.f32.mrb[0].mxu0
    %v1834 = vadd.f32 %v1771, %v1833
    %v1835 = vpop.f32.mrb[0].mxu0
    %v1836 = vadd.f32 %v1773, %v1835
    %v1837 = vpop.f32.mrb[0].mxu0
    %v1838 = vadd.f32 %v1775, %v1837
    %v1839 = vpop.f32.mrb[0].mxu0
    %v1840 = vadd.f32 %v1777, %v1839
    %1841 = vmatprep.mubr.bf16.mxu0 %v104
    %1842 = vmatmul.mubr.bf16.gmra.mrb[0].mxu0 %v103
    %v1843 = vpop.f32.mrb[0].mxu0
    %v1844 = vadd.f32 %v1781, %v1843
    %v1845 = vpop.f32.mrb[0].mxu0
    %v1846 = vadd.f32 %v1783, %v1845
    %v1847 = vpop.f32.mrb[0].mxu0
    %v1848 = vadd.f32 %v1785, %v1847
    %v1849 = vpop.f32.mrb[0].mxu0
    %v1850 = vadd.f32 %v1787, %v1849
    %1851 = vmatprep.mubr.bf16.mxu0 %v112
    %1852 = vmatmul.mubr.bf16.gmra.mrb[0].mxu0 %v111
    %v1853 = vpop.f32.mrb[0].mxu0
    %v1854 = vadd.f32 %v1791, %v1853
    %v1855 = vpop.f32.mrb[0].mxu0
    %v1856 = vadd.f32 %v1793, %v1855
    %v1857 = vpop.f32.mrb[0].mxu0
    %v1858 = vadd.f32 %v1795, %v1857
    %v1859 = vpop.f32.mrb[0].mxu0
    %v1860 = vadd.f32 %v1797, %v1859
    %1861 = vdwg.mxu0
    %1862 = vmatprep.subr.bf16.mxu0 %v1354
    %1863 = vmatpush1.bf16.msra.mxu0 %v1353
    %1864 = vmatprep.subr.bf16.mxu0 %v1358
    %1865 = vmatpush1.bf16.msra.mxu0 %v1357
    %1866 = vmatprep.subr.bf16.mxu0 %v1362
    %1867 = vmatpush1.bf16.msra.mxu0 %v1361
    %1868 = vmatprep.subr.bf16.mxu0 %v1366
    %1869 = vmatpush1.bf16.msra.mxu0 %v1365
    %1870 = vmatprep.subr.bf16.mxu0 %v1370
    %1871 = vmatpush1.bf16.msra.mxu0 %v1369
    %1872 = vmatprep.subr.bf16.mxu0 %v1374
    %1873 = vmatpush1.bf16.msra.mxu0 %v1373
    %1874 = vmatprep.subr.bf16.mxu0 %v1378
    %1875 = vmatpush1.bf16.msra.mxu0 %v1377
    %1876 = vmatprep.subr.bf16.mxu0 %v1382
    %1877 = vmatpush1.bf16.msra.mxu0 %v1381
    %1878 = vmatprep.subr.bf16.mxu0 %v1386
    %1879 = vmatpush1.bf16.msra.mxu0 %v1385
    %1880 = vmatprep.subr.bf16.mxu0 %v1390
    %1881 = vmatpush1.bf16.msra.mxu0 %v1389
    %1882 = vmatprep.subr.bf16.mxu0 %v1394
    %1883 = vmatpush1.bf16.msra.mxu0 %v1393
    %1884 = vmatprep.subr.bf16.mxu0 %v1398
    %1885 = vmatpush1.bf16.msra.mxu0 %v1397
    %1886 = vmatprep.subr.bf16.mxu0 %v1402
    %1887 = vmatpush1.bf16.msra.mxu0 %v1401
    %1888 = vmatprep.subr.bf16.mxu0 %v1406
    %1889 = vmatpush1.bf16.msra.mxu0 %v1405
    %1890 = vmatprep.subr.bf16.mxu0 %v1410
    %1891 = vmatpush1.bf16.msra.mxu0 %v1409
    %1892 = vmatprep.subr.bf16.mxu0 %v1414
    %1893 = vmatpush1.bf16.msra.mxu0 %v1413
    %1894 = vmatprep.mubr.bf16.mxu0 %v98
    %1895 = vmatmul.mubr.bf16.gmra.mrb[0].mxu0 %v97
    %v1896 = vpop.f32.mrb[0].mxu0
    %v1897 = vadd.f32 %v1834, %v1896
    %v1898 = vpop.f32.mrb[0].mxu0
    %v1899 = vadd.f32 %v1836, %v1898
    %v1900 = vpop.f32.mrb[0].mxu0
    %v1901 = vadd.f32 %v1838, %v1900
    %v1902 = vpop.f32.mrb[0].mxu0
    %v1903 = vadd.f32 %v1840, %v1902
    %1904 = vmatprep.mubr.bf16.mxu0 %v106
    %1905 = vmatmul.mubr.bf16.gmra.mrb[0].mxu0 %v105
    %v1906 = vpop.f32.mrb[0].mxu0
    %v1907 = vadd.f32 %v1844, %v1906
    %v1908 = vpop.f32.mrb[0].mxu0
    %v1909 = vadd.f32 %v1846, %v1908
    %v1910 = vpop.f32.mrb[0].mxu0
    %v1911 = vadd.f32 %v1848, %v1910
    %v1912 = vpop.f32.mrb[0].mxu0
    %v1913 = vadd.f32 %v1850, %v1912
    %1914 = vmatprep.mubr.bf16.mxu0 %v114
    %1915 = vmatmul.mubr.bf16.gmra.mrb[0].mxu0 %v113
    %v1916 = vpop.f32.mrb[0].mxu0
    %v1917 = vadd.f32 %v1854, %v1916
    %v1918 = vpop.f32.mrb[0].mxu0
    %v1919 = vadd.f32 %v1856, %v1918
    %v1920 = vpop.f32.mrb[0].mxu0
    %v1921 = vadd.f32 %v1858, %v1920
    %v1922 = vpop.f32.mrb[0].mxu0
    %v1923 = vadd.f32 %v1860, %v1922
    %1924 = vdwg.mxu0
    %1925 = vmatprep.subr.bf16.mxu0 %v1164
    %1926 = vmatpush1.bf16.msra.mxu0 %v1163
    %1927 = vmatprep.subr.bf16.mxu0 %v1168
    %1928 = vmatpush1.bf16.msra.mxu0 %v1167
    %1929 = vmatprep.subr.bf16.mxu0 %v1172
    %1930 = vmatpush1.bf16.msra.mxu0 %v1171
    %1931 = vmatprep.subr.bf16.mxu0 %v1176
    %1932 = vmatpush1.bf16.msra.mxu0 %v1175
    %1933 = vmatprep.subr.bf16.mxu0 %v1180
    %1934 = vmatpush1.bf16.msra.mxu0 %v1179
    %1935 = vmatprep.subr.bf16.mxu0 %v1184
    %1936 = vmatpush1.bf16.msra.mxu0 %v1183
    %1937 = vmatprep.subr.bf16.mxu0 %v1188
    %1938 = vmatpush1.bf16.msra.mxu0 %v1187
    %1939 = vmatprep.subr.bf16.mxu0 %v1192
    %1940 = vmatpush1.bf16.msra.mxu0 %v1191
    %1941 = vmatprep.subr.bf16.mxu0 %v1196
    %1942 = vmatpush1.bf16.msra.mxu0 %v1195
    %1943 = vmatprep.subr.bf16.mxu0 %v1200
    %1944 = vmatpush1.bf16.msra.mxu0 %v1199
    %1945 = vmatprep.subr.bf16.mxu0 %v1204
    %1946 = vmatpush1.bf16.msra.mxu0 %v1203
    %1947 = vmatprep.subr.bf16.mxu0 %v1208
    %1948 = vmatpush1.bf16.msra.mxu0 %v1207
    %1949 = vmatprep.subr.bf16.mxu0 %v1212
    %1950 = vmatpush1.bf16.msra.mxu0 %v1211
    %1951 = vmatprep.subr.bf16.mxu0 %v1216
    %1952 = vmatpush1.bf16.msra.mxu0 %v1215
    %1953 = vmatprep.subr.bf16.mxu0 %v1220
    %1954 = vmatpush1.bf16.msra.mxu0 %v1219
    %1955 = vmatprep.subr.bf16.mxu0 %v1224
    %1956 = vmatpush1.bf16.msra.mxu0 %v1223
    %1957 = vmatprep.mubr.bf16.mxu0 %v92
    %1958 = vmatmul.mubr.bf16.gmra.mrb[0].mxu0 %v91
    %v1959 = vpop.f32.mrb[0].mxu0
    %v1960 = vadd.f32 %v384, %v1959
    %v1961 = vpop.f32.mrb[0].mxu0
    %v1962 = vadd.f32 %v388, %v1961
    %v1963 = vpop.f32.mrb[0].mxu0
    %v1964 = vadd.f32 %v384, %v1963
    %v1965 = vpop.f32.mrb[0].mxu0
    %v1966 = vadd.f32 %v388, %v1965
    %1967 = vmatprep.mubr.bf16.mxu0 %v100
    %1968 = vmatmul.mubr.bf16.gmra.mrb[0].mxu0 %v99
    %v1969 = vpop.f32.mrb[0].mxu0
    %v1970 = vadd.f32 %v384, %v1969
    %v1971 = vpop.f32.mrb[0].mxu0
    %v1972 = vadd.f32 %v388, %v1971
    %v1973 = vpop.f32.mrb[0].mxu0
    %v1974 = vadd.f32 %v384, %v1973
    %v1975 = vpop.f32.mrb[0].mxu0
    %v1976 = vadd.f32 %v388, %v1975
    %1977 = vmatprep.mubr.bf16.mxu0 %v108
    %1978 = vmatmul.mubr.bf16.gmra.mrb[0].mxu0 %v107
    %v1979 = vpop.f32.mrb[0].mxu0
    %v1980 = vadd.f32 %v384, %v1979
    %v1981 = vpop.f32.mrb[0].mxu0
    %v1982 = vadd.f32 %v388, %v1981
    %v1983 = vpop.f32.mrb[0].mxu0
    %v1984 = vadd.f32 %v384, %v1983
    %v1985 = vpop.f32.mrb[0].mxu0
    %v1986 = vadd.f32 %v388, %v1985
    %1987 = vdwg.mxu0
    %1988 = vmatprep.subr.bf16.mxu0 %v1228
    %1989 = vmatpush1.bf16.msra.mxu0 %v1227
    %1990 = vmatprep.subr.bf16.mxu0 %v1232
    %1991 = vmatpush1.bf16.msra.mxu0 %v1231
    %1992 = vmatprep.subr.bf16.mxu0 %v1236
    %1993 = vmatpush1.bf16.msra.mxu0 %v1235
    %1994 = vmatprep.subr.bf16.mxu0 %v1240
    %1995 = vmatpush1.bf16.msra.mxu0 %v1239
    %1996 = vmatprep.subr.bf16.mxu0 %v1244
    %1997 = vmatpush1.bf16.msra.mxu0 %v1243
    %1998 = vmatprep.subr.bf16.mxu0 %v1248
    %1999 = vmatpush1.bf16.msra.mxu0 %v1247
    %2000 = vmatprep.subr.bf16.mxu0 %v1252
    %2001 = vmatpush1.bf16.msra.mxu0 %v1251
    %2002 = vmatprep.subr.bf16.mxu0 %v1256
    %2003 = vmatpush1.bf16.msra.mxu0 %v1255
    %2004 = vmatprep.subr.bf16.mxu0 %v1260
    %2005 = vmatpush1.bf16.msra.mxu0 %v1259
    %2006 = vmatprep.subr.bf16.mxu0 %v1264
    %2007 = vmatpush1.bf16.msra.mxu0 %v1263
    %2008 = vmatprep.subr.bf16.mxu0 %v1268
    %2009 = vmatpush1.bf16.msra.mxu0 %v1267
    %2010 = vmatprep.subr.bf16.mxu0 %v1272
    %2011 = vmatpush1.bf16.msra.mxu0 %v1271
    %2012 = vmatprep.subr.bf16.mxu0 %v1276
    %2013 = vmatpush1.bf16.msra.mxu0 %v1275
    %2014 = vmatprep.subr.bf16.mxu0 %v1280
    %2015 = vmatpush1.bf16.msra.mxu0 %v1279
    %2016 = vmatprep.subr.bf16.mxu0 %v1284
    %2017 = vmatpush1.bf16.msra.mxu0 %v1283
    %2018 = vmatprep.subr.bf16.mxu0 %v1288
    %2019 = vmatpush1.bf16.msra.mxu0 %v1287
    %2020 = vmatprep.mubr.bf16.mxu0 %v94
    %2021 = vmatmul.mubr.bf16.gmra.mrb[0].mxu0 %v93
    %v2022 = vpop.f32.mrb[0].mxu0
    %v2023 = vadd.f32 %v1960, %v2022
    %v2024 = vpop.f32.mrb[0].mxu0
    %v2025 = vadd.f32 %v1962, %v2024
    %v2026 = vpop.f32.mrb[0].mxu0
    %v2027 = vadd.f32 %v1964, %v2026
    %v2028 = vpop.f32.mrb[0].mxu0
    %v2029 = vadd.f32 %v1966, %v2028
    %2030 = vmatprep.mubr.bf16.mxu0 %v102
    %2031 = vmatmul.mubr.bf16.gmra.mrb[0].mxu0 %v101
    %v2032 = vpop.f32.mrb[0].mxu0
    %v2033 = vadd.f32 %v1970, %v2032
    %v2034 = vpop.f32.mrb[0].mxu0
    %v2035 = vadd.f32 %v1972, %v2034
    %v2036 = vpop.f32.mrb[0].mxu0
    %v2037 = vadd.f32 %v1974, %v2036
    %v2038 = vpop.f32.mrb[0].mxu0
    %v2039 = vadd.f32 %v1976, %v2038
    %2040 = vmatprep.mubr.bf16.mxu0 %v110
    %2041 = vmatmul.mubr.bf16.gmra.mrb[0].mxu0 %v109
    %v2042 = vpop.f32.mrb[0].mxu0
    %v2043 = vadd.f32 %v1980, %v2042
    %v2044 = vpop.f32.mrb[0].mxu0
    %v2045 = vadd.f32 %v1982, %v2044
    %v2046 = vpop.f32.mrb[0].mxu0
    %v2047 = vadd.f32 %v1984, %v2046
    %v2048 = vpop.f32.mrb[0].mxu0
    %v2049 = vadd.f32 %v1986, %v2048
    %2050 = vdwg.mxu0
    %2051 = vmatprep.subr.bf16.mxu0 %v1292
    %2052 = vmatpush1.bf16.msra.mxu0 %v1291
    %2053 = vmatprep.subr.bf16.mxu0 %v1296
    %2054 = vmatpush1.bf16.msra.mxu0 %v1295
    %2055 = vmatprep.subr.bf16.mxu0 %v1300
    %2056 = vmatpush1.bf16.msra.mxu0 %v1299
    %2057 = vmatprep.subr.bf16.mxu0 %v1304
    %2058 = vmatpush1.bf16.msra.mxu0 %v1303
    %2059 = vmatprep.subr.bf16.mxu0 %v1308
    %2060 = vmatpush1.bf16.msra.mxu0 %v1307
    %2061 = vmatprep.subr.bf16.mxu0 %v1312
    %2062 = vmatpush1.bf16.msra.mxu0 %v1311
    %2063 = vmatprep.subr.bf16.mxu0 %v1316
    %2064 = vmatpush1.bf16.msra.mxu0 %v1315
    %2065 = vmatprep.subr.bf16.mxu0 %v1320
    %2066 = vmatpush1.bf16.msra.mxu0 %v1319
    %2067 = vmatprep.subr.bf16.mxu0 %v1324
    %2068 = vmatpush1.bf16.msra.mxu0 %v1323
    %2069 = vmatprep.subr.bf16.mxu0 %v1328
    %2070 = vmatpush1.bf16.msra.mxu0 %v1327
    %2071 = vmatprep.subr.bf16.mxu0 %v1332
    %2072 = vmatpush1.bf16.msra.mxu0 %v1331
    %2073 = vmatprep.subr.bf16.mxu0 %v1336
    %2074 = vmatpush1.bf16.msra.mxu0 %v1335
    %2075 = vmatprep.subr.bf16.mxu0 %v1340
    %2076 = vmatpush1.bf16.msra.mxu0 %v1339
    %2077 = vmatprep.subr.bf16.mxu0 %v1344
    %2078 = vmatpush1.bf16.msra.mxu0 %v1343
    %2079 = vmatprep.subr.bf16.mxu0 %v1348
    %2080 = vmatpush1.bf16.msra.mxu0 %v1347
    %2081 = vmatprep.subr.bf16.mxu0 %v1352
    %2082 = vmatpush1.bf16.msra.mxu0 %v1351
    %2083 = vmatprep.mubr.bf16.mxu0 %v96
    %2084 = vmatmul.mubr.bf16.gmra.mrb[0].mxu0 %v95
    %v2085 = vpop.f32.mrb[0].mxu0
    %v2086 = vadd.f32 %v2023, %v2085
    %v2087 = vpop.f32.mrb[0].mxu0
    %v2088 = vadd.f32 %v2025, %v2087
    %v2089 = vpop.f32.mrb[0].mxu0
    %v2090 = vadd.f32 %v2027, %v2089
    %v2091 = vpop.f32.mrb[0].mxu0
    %v2092 = vadd.f32 %v2029, %v2091
    %2093 = vmatprep.mubr.bf16.mxu0 %v104
    %2094 = vmatmul.mubr.bf16.gmra.mrb[0].mxu0 %v103
    %v2095 = vpop.f32.mrb[0].mxu0
    %v2096 = vadd.f32 %v2033, %v2095
    %v2097 = vpop.f32.mrb[0].mxu0
    %v2098 = vadd.f32 %v2035, %v2097
    %v2099 = vpop.f32.mrb[0].mxu0
    %v2100 = vadd.f32 %v2037, %v2099
    %v2101 = vpop.f32.mrb[0].mxu0
    %v2102 = vadd.f32 %v2039, %v2101
    %2103 = vmatprep.mubr.bf16.mxu0 %v112
    %2104 = vmatmul.mubr.bf16.gmra.mrb[0].mxu0 %v111
    %v2105 = vpop.f32.mrb[0].mxu0
    %v2106 = vadd.f32 %v2043, %v2105
    %v2107 = vpop.f32.mrb[0].mxu0
    %v2108 = vadd.f32 %v2045, %v2107
    %v2109 = vpop.f32.mrb[0].mxu0
    %v2110 = vadd.f32 %v2047, %v2109
    %v2111 = vpop.f32.mrb[0].mxu0
    %v2112 = vadd.f32 %v2049, %v2111
    %2113 = vdwg.mxu0
    %2114 = vmatprep.subr.bf16.mxu0 %v1356
    %2115 = vmatpush1.bf16.msra.mxu0 %v1355
    %2116 = vmatprep.subr.bf16.mxu0 %v1360
    %2117 = vmatpush1.bf16.msra.mxu0 %v1359
    %2118 = vmatprep.subr.bf16.mxu0 %v1364
    %2119 = vmatpush1.bf16.msra.mxu0 %v1363
    %2120 = vmatprep.subr.bf16.mxu0 %v1368
    %2121 = vmatpush1.bf16.msra.mxu0 %v1367
    %2122 = vmatprep.subr.bf16.mxu0 %v1372
    %2123 = vmatpush1.bf16.msra.mxu0 %v1371
    %2124 = vmatprep.subr.bf16.mxu0 %v1376
    %2125 = vmatpush1.bf16.msra.mxu0 %v1375
    %2126 = vmatprep.subr.bf16.mxu0 %v1380
    %2127 = vmatpush1.bf16.msra.mxu0 %v1379
    %2128 = vmatprep.subr.bf16.mxu0 %v1384
    %2129 = vmatpush1.bf16.msra.mxu0 %v1383
    %2130 = vmatprep.subr.bf16.mxu0 %v1388
    %2131 = vmatpush1.bf16.msra.mxu0 %v1387
    %2132 = vmatprep.subr.bf16.mxu0 %v1392
    %2133 = vmatpush1.bf16.msra.mxu0 %v1391
    %2134 = vmatprep.subr.bf16.mxu0 %v1396
    %2135 = vmatpush1.bf16.msra.mxu0 %v1395
    %2136 = vmatprep.subr.bf16.mxu0 %v1400
    %2137 = vmatpush1.bf16.msra.mxu0 %v1399
    %2138 = vmatprep.subr.bf16.mxu0 %v1404
    %2139 = vmatpush1.bf16.msra.mxu0 %v1403
    %2140 = vmatprep.subr.bf16.mxu0 %v1408
    %2141 = vmatpush1.bf16.msra.mxu0 %v1407
    %2142 = vmatprep.subr.bf16.mxu0 %v1412
    %2143 = vmatpush1.bf16.msra.mxu0 %v1411
    %2144 = vmatprep.subr.bf16.mxu0 %v1416
    %2145 = vmatpush1.bf16.msra.mxu0 %v1415
    %2146 = vmatprep.mubr.bf16.mxu0 %v98
    %2147 = vmatmul.mubr.bf16.gmra.mrb[0].mxu0 %v97
    %v2148 = vpop.f32.mrb[0].mxu0
    %v2149 = vadd.f32 %v2086, %v2148
    %v2150 = vpop.f32.mrb[0].mxu0
    %v2151 = vadd.f32 %v2088, %v2150
    %v2152 = vpop.f32.mrb[0].mxu0
    %v2153 = vadd.f32 %v2090, %v2152
    %v2154 = vpop.f32.mrb[0].mxu0
    %v2155 = vadd.f32 %v2092, %v2154
    %2156 = vmatprep.mubr.bf16.mxu0 %v106
    %2157 = vmatmul.mubr.bf16.gmra.mrb[0].mxu0 %v105
    %v2158 = vpop.f32.mrb[0].mxu0
    %v2159 = vadd.f32 %v2096, %v2158
    %v2160 = vpop.f32.mrb[0].mxu0
    %v2161 = vadd.f32 %v2098, %v2160
    %v2162 = vpop.f32.mrb[0].mxu0
    %v2163 = vadd.f32 %v2100, %v2162
    %v2164 = vpop.f32.mrb[0].mxu0
    %v2165 = vadd.f32 %v2102, %v2164
    %2166 = vmatprep.mubr.bf16.mxu0 %v114
    %2167 = vmatmul.mubr.bf16.gmra.mrb[0].mxu0 %v113
    %v2168 = vpop.f32.mrb[0].mxu0
    %v2169 = vadd.f32 %v2106, %v2168
    %v2170 = vpop.f32.mrb[0].mxu0
    %v2171 = vadd.f32 %v2108, %v2170
    %v2172 = vpop.f32.mrb[0].mxu0
    %v2173 = vadd.f32 %v2110, %v2172
    %v2174 = vpop.f32.mrb[0].mxu0
    %v2175 = vadd.f32 %v2112, %v2174
    %2176 = vdwg.mxu0
    %vm2177 = vcmp.ge.f32.partialorder %v1897, 0.0
    %vm2178 = vcmp.ge.f32.partialorder %v1899, 0.0
    %vm2179 = vcmp.ge.f32.partialorder %v2149, 0.0
    %vm2180 = vcmp.ge.f32.partialorder %v2151, 0.0
    %vm2181 = vcmp.ge.f32.partialorder %v1901, 0.0
    %vm2182 = vcmp.ge.f32.partialorder %v1903, 0.0
    %vm2183 = vcmp.ge.f32.partialorder %v2153, 0.0
    %vm2184 = vcmp.ge.f32.partialorder %v2155, 0.0
    %vm2185 = vcmp.ge.f32.partialorder %v1907, 0.0
    %vm2186 = vcmp.ge.f32.partialorder %v1909, 0.0
    %vm2187 = vcmp.ge.f32.partialorder %v2159, 0.0
    %vm2188 = vcmp.ge.f32.partialorder %v2161, 0.0
    %vm2189 = vcmp.ge.f32.partialorder %v1911, 0.0
    %vm2190 = vcmp.ge.f32.partialorder %v1913, 0.0
    %vm2191 = vcmp.ge.f32.partialorder %v2163, 0.0
    %vm2192 = vcmp.ge.f32.partialorder %v2165, 0.0
    %vm2193 = vcmp.ge.f32.partialorder %v1917, 0.0
    %vm2194 = vcmp.ge.f32.partialorder %v1919, 0.0
    %vm2195 = vcmp.ge.f32.partialorder %v2169, 0.0
    %vm2196 = vcmp.ge.f32.partialorder %v2171, 0.0
    %vm2197 = vcmp.ge.f32.partialorder %v1921, 0.0
    %vm2198 = vcmp.ge.f32.partialorder %v1923, 0.0
    %vm2199 = vcmp.ge.f32.partialorder %v2173, 0.0
    %vm2200 = vcmp.ge.f32.partialorder %v2175, 0.0
    %v2201 = vmul.f32 %v1897, 0.01
    %v2202 = vmul.f32 %v1899, 0.01
    %v2203 = vmul.f32 %v2149, 0.01
    %v2204 = vmul.f32 %v2151, 0.01
    %v2205 = vmul.f32 %v1901, 0.01
    %v2206 = vmul.f32 %v1903, 0.01
    %v2207 = vmul.f32 %v2153, 0.01
    %v2208 = vmul.f32 %v2155, 0.01
    %v2209 = vmul.f32 %v1907, 0.01
    %v2210 = vmul.f32 %v1909, 0.01
    %v2211 = vmul.f32 %v2159, 0.01
    %v2212 = vmul.f32 %v2161, 0.01
    %v2213 = vmul.f32 %v1911, 0.01
    %v2214 = vmul.f32 %v1913, 0.01
    %v2215 = vmul.f32 %v2163, 0.01
    %v2216 = vmul.f32 %v2165, 0.01
    %v2217 = vmul.f32 %v1917, 0.01
    %v2218 = vmul.f32 %v1919, 0.01
    %v2219 = vmul.f32 %v2169, 0.01
    %v2220 = vmul.f32 %v2171, 0.01
    %v2221 = vmul.f32 %v1921, 0.01
    %v2222 = vmul.f32 %v1923, 0.01
    %v2223 = vmul.f32 %v2173, 0.01
    %v2224 = vmul.f32 %v2175, 0.01
    %v2225 = vsel %vm2177, %v1897, %v2201
    %v2226 = vsel %vm2178, %v1899, %v2202
    %v2227 = vsel %vm2179, %v2149, %v2203
    %v2228 = vsel %vm2180, %v2151, %v2204
    %v2229 = vsel %vm2181, %v1901, %v2205
    %v2230 = vsel %vm2182, %v1903, %v2206
    %v2231 = vsel %vm2183, %v2153, %v2207
    %v2232 = vsel %vm2184, %v2155, %v2208
    %v2233 = vsel %vm2185, %v1907, %v2209
    %v2234 = vsel %vm2186, %v1909, %v2210
    %v2235 = vsel %vm2187, %v2159, %v2211
    %v2236 = vsel %vm2188, %v2161, %v2212
    %v2237 = vsel %vm2189, %v1911, %v2213
    %v2238 = vsel %vm2190, %v1913, %v2214
    %v2239 = vsel %vm2191, %v2163, %v2215
    %v2240 = vsel %vm2192, %v2165, %v2216
    %v2241 = vsel %vm2193, %v1917, %v2217
    %v2242 = vsel %vm2194, %v1919, %v2218
    %v2243 = vsel %vm2195, %v2169, %v2219
    %v2244 = vsel %vm2196, %v2171, %v2220
    %v2245 = vsel %vm2197, %v1921, %v2221
    %v2246 = vsel %vm2198, %v1923, %v2222
    %v2247 = vsel %vm2199, %v2173, %v2223
    %v2248 = vsel %vm2200, %v2175, %v2224
    %2249 = vst [vmem:[#allocation7] sm:$0xff] %v2225
    %2250 = vst [vmem:[#allocation7 + $0x8] sm:$0xff] %v2226
    %2251 = vst [vmem:[#allocation7 + $0x10] sm:$0xff] %v2227
    %2252 = vst [vmem:[#allocation7 + $0x18] sm:$0xff] %v2228
    %2253 = vst [vmem:[#allocation7 + $0x20] sm:$0xff] %v2229
    %2254 = vst [vmem:[#allocation7 + $0x28] sm:$0xff] %v2230
    %2255 = vst [vmem:[#allocation7 + $0x30] sm:$0xff] %v2231
    %2256 = vst [vmem:[#allocation7 + $0x38] sm:$0xff] %v2232
    %2257 = vst [vmem:[#allocation7 + $0x40] sm:$0xff] %v2233
    %2258 = vst [vmem:[#allocation7 + $0x48] sm:$0xff] %v2234
    %2259 = vst [vmem:[#allocation7 + $0x50] sm:$0xff] %v2235
    %2260 = vst [vmem:[#allocation7 + $0x58] sm:$0xff] %v2236
    %2261 = vst [vmem:[#allocation7 + $0x60] sm:$0xff] %v2237
    %2262 = vst [vmem:[#allocation7 + $0x68] sm:$0xff] %v2238
    %2263 = vst [vmem:[#allocation7 + $0x70] sm:$0xff] %v2239
    %2264 = vst [vmem:[#allocation7 + $0x78] sm:$0xff] %v2240
    %2265 = vst [vmem:[#allocation7 + $0x80] sm:$0xff] %v2241
    %2266 = vst [vmem:[#allocation7 + $0x88] sm:$0xff] %v2242
    %2267 = vst [vmem:[#allocation7 + $0x90] sm:$0xff] %v2243
    %2268 = vst [vmem:[#allocation7 + $0x98] sm:$0xff] %v2244
    %2269 = vst [vmem:[#allocation7 + $0xa0] sm:$0xff] %v2245
    %2270 = vst [vmem:[#allocation7 + $0xa8] sm:$0xff] %v2246
    %2271 = vst [vmem:[#allocation7 + $0xb0] sm:$0xff] %v2247
    %2272 = vst [vmem:[#allocation7 + $0xb8] sm:$0xff] %v2248
    // Predicated region
    $region22: #{tpu_custom_call.1} parent=1 // pred_check
      _
    $region23: #{tpu_custom_call.1} parent=1 // pred_check_branch
      %2274 = sbr.rel (0) target = $region25
    $region24: #{tpu_custom_call.1} parent=1 // pred_region
      %s2276 = ssub.s32 3072, 3072
      %2277 = vsyncadd [#allocation4], %s2276
      %s2278 = sshll.u32 [#allocation7], 4
      %s2279 = int_to_ptr.vmem [resolvable:$true] %s2278
      %2284 = dma.vmem_to_hbm [thread:$0]  %s2279, 3072, %s3, [#allocation4], 512, 512, 32
    $region25: #{tpu_custom_call.1} parent=1 // pred_fallthru
      _
    // Predicated region
    $region26: #{tpu_custom_call.1} parent=1 // pred_check
      _
    $region27: #{tpu_custom_call.1} parent=1 // pred_check_branch
      %2286 = sbr.rel (0) target = $region29
    $region28: #{tpu_custom_call.1} parent=1 // pred_region
      %2287 = dma.done [#allocation4], 3072
    $region29: #{tpu_custom_call.1} parent=1 // pred_fallthru
      _
    %2288 = vsyncpa [#allocation3], 1
    %2289 = vsyncpa [#allocation6], 1
    %2290 = vsyncpa [#allocation4], 1

</llo_original>
